<compile_context>
chip_gen: v6e
topology: v6e:2x2x1
jax: 0.10.0
libtpu: 0.0.40
codegen_flags: <defaults>
</compile_context>

<pallas_src>
import functools

import jax
import jax.numpy as jnp
from jax.experimental import pallas as pl
from jax.experimental.pallas import tpu as pltpu


# ----------------------------- Pallas kernels -----------------------------

def conv_bn_kernel(w_ref, x_ref, shift_ref, o_ref):
    """Transposed im2col conv with BN(eval) scale pre-folded into the weights.

    w_ref:     (Cout, K)   f32   (already multiplied by gamma * rsqrt(var+eps))
    x_ref:     (K, tm)     f32   (tm is a multiple of 128 -> lane-dense out)
    shift_ref: (Cout, 1)   f32   ((bias - mean) * scale + beta)
    o_ref:     (Cout, tm)  f32
    """
    o_ref[...] = (
        jnp.dot(w_ref[...], x_ref[...], preferred_element_type=jnp.float32)
        + shift_ref[...]
    )


def gelu_fc_kernel(x_ref, w_ref, b_ref, o_ref):
    """Exact (erf-based) GELU followed by Linear."""
    x = x_ref[...]
    g = 0.5 * x * (1.0 + jax.lax.erf(x * 0.7071067811865476))
    o_ref[...] = jnp.dot(g, w_ref[...], preferred_element_type=jnp.float32) + b_ref[...]


# ----------------------------- wrappers ------------------------------------

def _round_up(x, m):
    return ((x + m - 1) // m) * m


def _pick_steps(M):
    # Keep tiles large (less per-step overhead); >=2 steps for big layers so
    # v7x's two TensorCores can split the "parallel" grid axis.
    if M >= 8192:
        return 4
    if M >= 2048:
        return 2
    return 1


def conv_bn_matmul_T(patches_T, w_scaled, shift):
    """Lane-dense tiled Pallas matmul+shift: out (Cout, M) = w_scaled @ patches_T."""
    K, M = patches_T.shape
    Cout = w_scaled.shape[0]

    steps = _pick_steps(M)
    tm = _round_up(-(-M // steps), 128)
    Mp = tm * steps
    if Mp != M:
        patches_T = jnp.pad(patches_T, ((0, 0), (0, Mp - M)))

    out = pl.pallas_call(
        conv_bn_kernel,
        out_shape=jax.ShapeDtypeStruct((Cout, Mp), jnp.float32),
        grid=(steps,),
        in_specs=[
            pl.BlockSpec((Cout, K), lambda i: (0, 0)),   # scaled weights, resident
            pl.BlockSpec((K, tm), lambda i: (0, i)),     # patch tile
            pl.BlockSpec((Cout, 1), lambda i: (0, 0)),   # shift
        ],
        out_specs=pl.BlockSpec((Cout, tm), lambda i: (0, i)),
        compiler_params=pltpu.CompilerParams(
            dimension_semantics=("parallel",),
        ),
    )(w_scaled, patches_T, shift)
    return out[:, :M]


def _strided_taps_cf(x, k, stride, Ho, Wo):
    """All k*k strided taps of a (C, N, H, W) array; each tap is (C, N, Ho, Wo)."""
    C, N, H, W = x.shape
    taps = []
    for kh in range(k):
        for kw in range(k):
            sl = jax.lax.slice(
                x,
                (0, 0, kh, kw),
                (C, N, kh + stride * (Ho - 1) + 1, kw + stride * (Wo - 1) + 1),
                (1, 1, stride, stride),
            )
            taps.append(sl)
    return taps


def conv_block(x_cf, w, b, gamma, beta, mean, var, padding, eps=1e-5):
    """Conv2d(k=4,s=2,p=padding) + BatchNorm2d(eval) + MaxPool2d(k=4,s=2).

    x_cf: channel-first activation (C, N, H, W), float32.
    Returns pooled activation, channel-first (Cout, N, Hp, Wp), float32.
    """
    C, N, H, W = x_cf.shape
    p = padding
    xp = jnp.pad(x_cf, ((0, 0), (0, 0), (p, p), (p, p)))
    Hq, Wq = H + 2 * p, W + 2 * p
    Ho = (Hq - 4) // 2 + 1
    Wo = (Wq - 4) // 2 + 1

    # im2col directly in (K, M) layout, K ordered (kh, kw, cin) to match the
    # (4, 4, cin, cout) weight reshape.  Everything stays float32.
    taps = _strided_taps_cf(xp, 4, 2, Ho, Wo)                  # 16 x (C,N,Ho,Wo)
    patches_T = jnp.stack(taps, axis=0).reshape(16 * C, N * Ho * Wo)

    Cout = w.shape[-1]
    wT = jnp.transpose(w.reshape(16 * C, Cout))                # (Cout, 16C)
    scale = (gamma * jax.lax.rsqrt(var + eps)).reshape(Cout, 1)
    w_scaled = wT * scale                                      # fold BN scale
    shift = ((b - mean) * scale[:, 0] + beta).reshape(Cout, 1)

    y = conv_bn_matmul_T(patches_T.astype(jnp.float32),
                         w_scaled.astype(jnp.float32),
                         shift.astype(jnp.float32))            # (Cout, M) f32
    y = y.reshape(Cout, N, Ho, Wo)

    # MaxPool2d(k=4, s=2): 15-op maximum tree over strided slices (XLA-fused,
    # no 16x stacked intermediate, no extra kernel launch).
    Hp = (Ho - 4) // 2 + 1
    Wp = (Wo - 4) // 2 + 1
    pooled = None
    for tap in _strided_taps_cf(y, 4, 2, Hp, Wp):
        pooled = tap if pooled is None else jnp.maximum(pooled, tap)
    return pooled                                              # (Cout, N, Hp, Wp)


def actor_forward(params, x_nchw, padding_size):
    # NCHW (PyTorch) -> channel-first (C, N, H, W) kernel layout.
    x = jnp.transpose(x_nchw, (1, 0, 2, 3)).astype(jnp.float32)
    for i in (1, 2, 3):
        x = conv_block(
            x,
            params[f"conv{i}_w"], params[f"conv{i}_b"],
            params[f"bn{i}_gamma"], params[f"bn{i}_beta"],
            params[f"bn{i}_mean"], params[f"bn{i}_var"],
            padding_size,
        )
    # PyTorch Flatten on NCHW: order is (C, H, W).
    Cf, N, Hf, Wf = x.shape
    feat = jnp.transpose(x, (1, 0, 2, 3)).reshape(N, Cf * Hf * Wf)

    out = pl.pallas_call(
        gelu_fc_kernel,
        out_shape=jax.ShapeDtypeStruct(
            (feat.shape[0], params["fc1_w"].shape[1]), jnp.float32),
        in_specs=[pl.BlockSpec(memory_space=pltpu.MemorySpace.VMEM)] * 3,
        out_specs=pl.BlockSpec(memory_space=pltpu.MemorySpace.VMEM),
    )(feat, params["fc1_w"], params["fc1_b"].reshape(1, -1))
    return out


# ----------------------------- parameters ----------------------------------

def init_params(key, in_channels, out_channels, linear_input_size, out_features):
    chans = [in_channels, out_channels, out_channels * 2, out_channels * 4]
    keys = jax.random.split(key, 8)
    params = {}
    for i in range(3):
        cin, cout = chans[i], chans[i + 1]
        kw, kb, kg, kbt, km, kv = jax.random.split(keys[i], 6)
        params[f"conv{i+1}_w"] = 0.05 * jax.random.normal(kw, (4, 4, cin, cout), jnp.float32)
        params[f"conv{i+1}_b"] = 0.05 * jax.random.normal(kb, (cout,), jnp.float32)
        params[f"bn{i+1}_gamma"] = 1.0 + 0.1 * jax.random.normal(kg, (cout,), jnp.float32)
        params[f"bn{i+1}_beta"] = 0.05 * jax.random.normal(kbt, (cout,), jnp.float32)
        params[f"bn{i+1}_mean"] = 0.05 * jax.random.normal(km, (cout,), jnp.float32)
        params[f"bn{i+1}_var"] = 0.9 + 0.1 * jnp.abs(jax.random.normal(kv, (cout,), jnp.float32))
    params["fc1_w"] = 0.1 * jax.random.normal(keys[6], (linear_input_size, out_features), jnp.float32)
    params["fc1_b"] = 0.05 * jax.random.normal(keys[7], (out_features,), jnp.float32)
    # (conv4 parameters exist in the PyTorch module but are unused in forward.)
    return params


# ----------------------------- main -----------------------------------------

if __name__ == "__main__":
    # Module hyperparameters.  The architecture (3x [conv k4 s2 + maxpool k4 s2])
    # needs spatial >= 148 with padding=1 for a valid forward pass; the final
    # feature map is (N, out_channels*4, 1, 1) -> linear_input_size = 32.
    in_channels = 4
    out_channels = 8
    padding_size = 1
    linear_input_size = out_channels * 4 * 1 * 1   # 32
    out_features = 5
    batch = 2
    spatial = 148

    key = jax.random.PRNGKey(0)
    kx, kp = jax.random.split(key)
    x = jax.random.normal(kx, (batch, in_channels, spatial, spatial), jnp.float32)
    params = init_params(kp, in_channels, out_channels, linear_input_size, out_features)

    fwd = jax.jit(functools.partial(actor_forward, padding_size=padding_size))
    out = fwd(params, x)
    out = jax.block_until_ready(out)

    assert out.shape == (batch, out_features), out.shape
    assert bool(jnp.all(jnp.isfinite(out)))
    print("KERNEL_OK")
</pallas_src>

<mosaic_0001>
module attributes {stable_mosaic.version = 11 : i64} {
  func.func @conv_bn_kernel(%arg0: i32, %arg1: memref<8x64xf32, #tpu.memory_space<vmem>>, %arg2: memref<64x2816xf32, #tpu.memory_space<vmem>>, %arg3: memref<8x1xf32, #tpu.memory_space<vmem>>, %arg4: memref<8x2816xf32, #tpu.memory_space<vmem>>) attributes {dimension_semantics = [#tpu.dimension_semantics<parallel>], iteration_bounds = array<i64: 4>, scalar_prefetch = 0 : i64, scratch_operands = 0 : i64, tpu.core_type = #tpu.core_type<tc>, window_params = [{pipeline_mode = #tpu.pipeline_mode<synchronous>, transform_indices = @transform_0, window_bounds = array<i64: 8, 64>}, {transform_indices = @transform_1, window_bounds = array<i64: 64, 2816>}, {pipeline_mode = #tpu.pipeline_mode<synchronous>, transform_indices = @transform_2, window_bounds = array<i64: 8, 1>}, {transform_indices = @transform_3, window_bounds = array<i64: 8, 2816>}]} {
    %c0 = arith.constant 0 : index
    %c0_0 = arith.constant 0 : index
    %0 = vector.load %arg1[%c0, %c0_0] : memref<8x64xf32, #tpu.memory_space<vmem>>, vector<8x64xf32>
    %c0_1 = arith.constant 0 : index
    %c0_2 = arith.constant 0 : index
    %1 = vector.load %arg2[%c0_1, %c0_2] : memref<64x2816xf32, #tpu.memory_space<vmem>>, vector<64x2816xf32>
    %cst = arith.constant dense<0.000000e+00> : vector<8x2816xf32>
    %2 = tpu.matmul %0, %1, %cst {dimension_numbers = #tpu.dot_dimension_numbers<[1], [0], [0], [1], [0, 0, 1, 1], [], []>} : vector<8x64xf32>, vector<64x2816xf32>, vector<8x2816xf32> -> vector<8x2816xf32>
    %c0_3 = arith.constant 0 : index
    %c0_4 = arith.constant 0 : index
    %3 = vector.load %arg3[%c0_3, %c0_4] : memref<8x1xf32, #tpu.memory_space<vmem>>, vector<8x1xf32>
    %4 = vector.broadcast %3 : vector<8x1xf32> to vector<8x2816xf32>
    %5 = arith.addf %2, %4 : vector<8x2816xf32>
    %c0_5 = arith.constant 0 : index
    %c0_6 = arith.constant 0 : index
    %6 = vector.load %arg4[%c0_5, %c0_6] : memref<8x2816xf32, #tpu.memory_space<vmem>>, vector<8x2816xf32>
    tpu.vector_store %arg4[%c0_5, %c0_6], %5 {strides = array<i32>} : memref<8x2816xf32, #tpu.memory_space<vmem>>, vector<8x2816xf32>,
    return
  }
  func.func @transform_0(%arg0: i32) -> (i32, i32) {
    %c0_i32 = arith.constant 0 : i32
    %c0_i32_0 = arith.constant 0 : i32
    %c0_i32_1 = arith.constant 0 : i32
    return %c0_i32, %c0_i32_0 : i32, i32
  }
  func.func @transform_1(%arg0: i32) -> (i32, i32) {
    %c0_i32 = arith.constant 0 : i32
    %c0_i32_0 = arith.constant 0 : i32
    return %c0_i32, %arg0 : i32, i32
  }
  func.func @transform_2(%arg0: i32) -> (i32, i32) {
    %c0_i32 = arith.constant 0 : i32
    %c0_i32_0 = arith.constant 0 : i32
    %c0_i32_1 = arith.constant 0 : i32
    return %c0_i32, %c0_i32_0 : i32, i32
  }
  func.func @transform_3(%arg0: i32) -> (i32, i32) {
    %c0_i32 = arith.constant 0 : i32
    %c0_i32_0 = arith.constant 0 : i32
    return %c0_i32, %arg0 : i32, i32
  }
}

module attributes {stable_mosaic.version = 11 : i64} {
  func.func @conv_bn_kernel(%arg0: i32, %arg1: memref<16x128xf32, #tpu.memory_space<vmem>>, %arg2: memref<128x768xf32, #tpu.memory_space<vmem>>, %arg3: memref<16x1xf32, #tpu.memory_space<vmem>>, %arg4: memref<16x768xf32, #tpu.memory_space<vmem>>) attributes {dimension_semantics = [#tpu.dimension_semantics<parallel>], iteration_bounds = array<i64: 1>, scalar_prefetch = 0 : i64, scratch_operands = 0 : i64, tpu.core_type = #tpu.core_type<tc>, window_params = [{pipeline_mode = #tpu.pipeline_mode<synchronous>, transform_indices = @transform_0, window_bounds = array<i64: 16, 128>}, {transform_indices = @transform_1, window_bounds = array<i64: 128, 768>}, {pipeline_mode = #tpu.pipeline_mode<synchronous>, transform_indices = @transform_2, window_bounds = array<i64: 16, 1>}, {transform_indices = @transform_3, window_bounds = array<i64: 16, 768>}]} {
    %c0 = arith.constant 0 : index
    %c0_0 = arith.constant 0 : index
    %0 = vector.load %arg1[%c0, %c0_0] : memref<16x128xf32, #tpu.memory_space<vmem>>, vector<16x128xf32>
    %c0_1 = arith.constant 0 : index
    %c0_2 = arith.constant 0 : index
    %1 = vector.load %arg2[%c0_1, %c0_2] : memref<128x768xf32, #tpu.memory_space<vmem>>, vector<128x768xf32>
    %cst = arith.constant dense<0.000000e+00> : vector<16x768xf32>
    %2 = tpu.matmul %0, %1, %cst {dimension_numbers = #tpu.dot_dimension_numbers<[1], [0], [0], [1], [0, 0, 1, 1], [], []>} : vector<16x128xf32>, vector<128x768xf32>, vector<16x768xf32> -> vector<16x768xf32>
    %c0_3 = arith.constant 0 : index
    %c0_4 = arith.constant 0 : index
    %3 = vector.load %arg3[%c0_3, %c0_4] : memref<16x1xf32, #tpu.memory_space<vmem>>, vector<16x1xf32>
    %4 = vector.broadcast %3 : vector<16x1xf32> to vector<16x768xf32>
    %5 = arith.addf %2, %4 : vector<16x768xf32>
    %c0_5 = arith.constant 0 : index
    %c0_6 = arith.constant 0 : index
    %6 = vector.load %arg4[%c0_5, %c0_6] : memref<16x768xf32, #tpu.memory_space<vmem>>, vector<16x768xf32>
    tpu.vector_store %arg4[%c0_5, %c0_6], %5 {strides = array<i32>} : memref<16x768xf32, #tpu.memory_space<vmem>>, vector<16x768xf32>,
    return
  }
  func.func @transform_0(%arg0: i32) -> (i32, i32) {
    %c0_i32 = arith.constant 0 : i32
    %c0_i32_0 = arith.constant 0 : i32
    %c0_i32_1 = arith.constant 0 : i32
    return %c0_i32, %c0_i32_0 : i32, i32
  }
  func.func @transform_1(%arg0: i32) -> (i32, i32) {
    %c0_i32 = arith.constant 0 : i32
    %c0_i32_0 = arith.constant 0 : i32
    return %c0_i32, %arg0 : i32, i32
  }
  func.func @transform_2(%arg0: i32) -> (i32, i32) {
    %c0_i32 = arith.constant 0 : i32
    %c0_i32_0 = arith.constant 0 : i32
    %c0_i32_1 = arith.constant 0 : i32
    return %c0_i32, %c0_i32_0 : i32, i32
  }
  func.func @transform_3(%arg0: i32) -> (i32, i32) {
    %c0_i32 = arith.constant 0 : i32
    %c0_i32_0 = arith.constant 0 : i32
    return %c0_i32, %arg0 : i32, i32
  }
}

module attributes {stable_mosaic.version = 11 : i64} {
  func.func @conv_bn_kernel(%arg0: i32, %arg1: memref<32x256xf32, #tpu.memory_space<vmem>>, %arg2: memref<256x128xf32, #tpu.memory_space<vmem>>, %arg3: memref<32x1xf32, #tpu.memory_space<vmem>>, %arg4: memref<32x128xf32, #tpu.memory_space<vmem>>) attributes {dimension_semantics = [#tpu.dimension_semantics<parallel>], iteration_bounds = array<i64: 1>, scalar_prefetch = 0 : i64, scratch_operands = 0 : i64, tpu.core_type = #tpu.core_type<tc>, window_params = [{pipeline_mode = #tpu.pipeline_mode<synchronous>, transform_indices = @transform_0, window_bounds = array<i64: 32, 256>}, {transform_indices = @transform_1, window_bounds = array<i64: 256, 128>}, {pipeline_mode = #tpu.pipeline_mode<synchronous>, transform_indices = @transform_2, window_bounds = array<i64: 32, 1>}, {transform_indices = @transform_3, window_bounds = array<i64: 32, 128>}]} {
    %c0 = arith.constant 0 : index
    %c0_0 = arith.constant 0 : index
    %0 = vector.load %arg1[%c0, %c0_0] : memref<32x256xf32, #tpu.memory_space<vmem>>, vector<32x256xf32>
    %c0_1 = arith.constant 0 : index
    %c0_2 = arith.constant 0 : index
    %1 = vector.load %arg2[%c0_1, %c0_2] : memref<256x128xf32, #tpu.memory_space<vmem>>, vector<256x128xf32>
    %cst = arith.constant dense<0.000000e+00> : vector<32x128xf32>
    %2 = tpu.matmul %0, %1, %cst {dimension_numbers = #tpu.dot_dimension_numbers<[1], [0], [0], [1], [0, 0, 1, 1], [], []>} : vector<32x256xf32>, vector<256x128xf32>, vector<32x128xf32> -> vector<32x128xf32>
    %c0_3 = arith.constant 0 : index
    %c0_4 = arith.constant 0 : index
    %3 = vector.load %arg3[%c0_3, %c0_4] : memref<32x1xf32, #tpu.memory_space<vmem>>, vector<32x1xf32>
    %4 = vector.broadcast %3 : vector<32x1xf32> to vector<32x128xf32>
    %5 = arith.addf %2, %4 : vector<32x128xf32>
    %c0_5 = arith.constant 0 : index
    %c0_6 = arith.constant 0 : index
    %6 = vector.load %arg4[%c0_5, %c0_6] : memref<32x128xf32, #tpu.memory_space<vmem>>, vector<32x128xf32>
    tpu.vector_store %arg4[%c0_5, %c0_6], %5 {strides = array<i32>} : memref<32x128xf32, #tpu.memory_space<vmem>>, vector<32x128xf32>,
    return
  }
  func.func @transform_0(%arg0: i32) -> (i32, i32) {
    %c0_i32 = arith.constant 0 : i32
    %c0_i32_0 = arith.constant 0 : i32
    %c0_i32_1 = arith.constant 0 : i32
    return %c0_i32, %c0_i32_0 : i32, i32
  }
  func.func @transform_1(%arg0: i32) -> (i32, i32) {
    %c0_i32 = arith.constant 0 : i32
    %c0_i32_0 = arith.constant 0 : i32
    return %c0_i32, %arg0 : i32, i32
  }
  func.func @transform_2(%arg0: i32) -> (i32, i32) {
    %c0_i32 = arith.constant 0 : i32
    %c0_i32_0 = arith.constant 0 : i32
    %c0_i32_1 = arith.constant 0 : i32
    return %c0_i32, %c0_i32_0 : i32, i32
  }
  func.func @transform_3(%arg0: i32) -> (i32, i32) {
    %c0_i32 = arith.constant 0 : i32
    %c0_i32_0 = arith.constant 0 : i32
    return %c0_i32, %arg0 : i32, i32
  }
}

module attributes {stable_mosaic.version = 11 : i64} {
  func.func @gelu_fc_kernel(%arg0: memref<2x32xf32, #tpu.memory_space<vmem>>, %arg1: memref<32x5xf32, #tpu.memory_space<vmem>>, %arg2: memref<1x5xf32, #tpu.memory_space<vmem>>, %arg3: memref<2x5xf32, #tpu.memory_space<vmem>>) attributes {dimension_semantics = [], scalar_prefetch = 0 : i64, scratch_operands = 0 : i64, tpu.core_type = #tpu.core_type<tc>} {
    %c0 = arith.constant 0 : index
    %c0_0 = arith.constant 0 : index
    %0 = vector.load %arg0[%c0, %c0_0] : memref<2x32xf32, #tpu.memory_space<vmem>>, vector<2x32xf32>
    %cst = arith.constant 5.000000e-01 : f32
    %1 = vector.broadcast %cst : f32 to vector<2x32xf32>
    %2 = arith.mulf %1, %0 : vector<2x32xf32>
    %cst_1 = arith.constant 0.707106769 : f32
    %3 = vector.broadcast %cst_1 : f32 to vector<2x32xf32>
    %4 = arith.mulf %0, %3 : vector<2x32xf32>
    %5 = math.erf %4 : vector<2x32xf32>
    %cst_2 = arith.constant 1.000000e+00 : f32
    %6 = vector.broadcast %cst_2 : f32 to vector<2x32xf32>
    %7 = arith.addf %6, %5 : vector<2x32xf32>
    %8 = arith.mulf %2, %7 : vector<2x32xf32>
    %c0_3 = arith.constant 0 : index
    %c0_4 = arith.constant 0 : index
    %9 = vector.load %arg1[%c0_3, %c0_4] : memref<32x5xf32, #tpu.memory_space<vmem>>, vector<32x5xf32>
    %cst_5 = arith.constant dense<0.000000e+00> : vector<2x5xf32>
    %10 = tpu.matmul %8, %9, %cst_5 {dimension_numbers = #tpu.dot_dimension_numbers<[1], [0], [0], [1], [0, 0, 1, 1], [], []>} : vector<2x32xf32>, vector<32x5xf32>, vector<2x5xf32> -> vector<2x5xf32>
    %c0_6 = arith.constant 0 : index
    %c0_7 = arith.constant 0 : index
    %11 = vector.load %arg2[%c0_6, %c0_7] : memref<1x5xf32, #tpu.memory_space<vmem>>, vector<1x5xf32>
    %12 = vector.broadcast %11 : vector<1x5xf32> to vector<2x5xf32>
    %13 = arith.addf %10, %12 : vector<2x5xf32>
    %c0_8 = arith.constant 0 : index
    %c0_9 = arith.constant 0 : index
    %14 = vector.load %arg3[%c0_8, %c0_9] : memref<2x5xf32, #tpu.memory_space<vmem>>, vector<2x5xf32>
    tpu.vector_store %arg3[%c0_8, %c0_9], %13 {strides = array<i32>} : memref<2x5xf32, #tpu.memory_space<vmem>>, vector<2x5xf32>,
    return
  }
}

</mosaic_0001>

<llo_original>
// kernel: actor_forward.4
$region0: #{actor_forward.4}
  #allocation0 [shape = 'u32[]', space=smem, size = 0x4, offset = 0x4, fixed_abs, tag = 'smem constant byte address 0x4 - core index']
  #allocation1 [shape = 'u32[144,128]{1,0:T(1,128)}', space=vmem, size = 0x12000, scoped, tag = 'internal scratch']
  %s0 = inlined_call_operand.vmem [shape: f32[8,64], index: 0, kind: input, shape index: {}]
  %s1 = inlined_call_operand.vmem [shape: f32[64,11264], index: 1, kind: input, shape index: {}]
  %s2 = inlined_call_operand.vmem [shape: f32[8,1], index: 2, kind: input, shape index: {}]
  %s3 = inlined_call_operand.vmem [shape: f32[8,11264], index: 3, kind: output, shape index: {}]
  %s4 = sld [smem:[#allocation0]]
  $region68: #{actor_forward.4} parent=0
    _
  %s6 = ssub.s32 1, %s4
  %s7 = scalar_select 0, %s6, %s4
  $region1: #{actor_forward.4} parent=0
    #allocation2 [shape = 'u8[1441792]{0}', space=vmem, size = 0x160000, scoped, tag = 'input window, operand 1']
    loop: start=0, step=1, limit=6
    $region2: #{actor_forward.4} parent=1 // loop_pre_header
      _
    $region3: #{actor_forward.4} parent=1 // loop_header
      %s9 = sphi 0, %s13
      %p10 = scmp.ge.s32.totalorder %s9, 6
      %s17 = sphi 0, %s17
      %s19 = sphi 0, %s17
      %s20 = sphi 0, %s19
      %s34 = sphi 0, %s20
      %s40 = sphi 0, %s42
      %s43 = sphi 0, %s40
      %s44 = sphi 0, %s43
      %s60 = sphi 0, %s44
      %s64 = sphi 0, %s64
      %s66 = sphi 0, %s64
      %s67 = sphi 0, %s66
      %s81 = sphi 0, %s67
      %s87 = sphi 0, %s89
      %s90 = sphi 0, %s87
      %s91 = sphi 0, %s90
      %s107 = sphi 0, %s91
    $region4: #{actor_forward.4} parent=1 // loop_header_branch
      %12 = sbr.rel (%p10) target = $region8
    $region5: #{actor_forward.4} parent=1 // loop_body
      %s14 = ssub.s32 %s9, 1
      %s15 = ssub.s32 %s9, 2
      %s16 = sadd.s32 %s9, 1
      %s18 = sadd.s32 %s17, 1
      %p21 = scmp.eq.s32.totalorder %s9, 3
      %p22 = scmp.ne.s32.totalorder %s17, %s19
      %p23 = scmp.eq.s32.totalorder %s9, 0
      %p24 = por %p22, %p23
      %p25 = scmp.ne.s32.totalorder %s17, %s19
      %p26 = scmp.eq.s32.totalorder %s14, 3
      %p27 = por %p25, %p26
      %p28 = scmp.ne.s32.totalorder %s19, %s20
      %p29 = scmp.eq.s32.totalorder %s14, 0
      %p30 = por %p28, %p29
      %p31 = scmp.ne.s32.totalorder %s19, %s20
      %p32 = scmp.eq.s32.totalorder %s15, 3
      %p33 = por %p31, %p32
      %p35 = scmp.ne.s32.totalorder %s20, %s34
      %p36 = scmp.eq.s32.totalorder %s15, 0
      %p37 = por %p35, %p36
      %s38 = ssub.s32 %s9, %s16
      %p39 = scmp.eq.s32.totalorder %s38, 0
      %s41 = sadd.s32 %s40, 1
      %s42 = scalar_select %p39, %s40, %s41
      %p45 = pneg %p39
      %p46 = scmp.eq.s32.totalorder %s9, 3
      %p47 = por %p45, %p46
      %p48 = scmp.ne.s32.totalorder %s40, %s43
      %p49 = scmp.eq.s32.totalorder %s9, 0
      %p50 = por %p48, %p49
      %p51 = scmp.ne.s32.totalorder %s40, %s43
      %p52 = scmp.eq.s32.totalorder %s14, 3
      %p53 = por %p51, %p52
      %p54 = scmp.ne.s32.totalorder %s43, %s44
      %p55 = scmp.eq.s32.totalorder %s14, 0
      %p56 = por %p54, %p55
      %p57 = scmp.ne.s32.totalorder %s43, %s44
      %p58 = scmp.eq.s32.totalorder %s15, 3
      %p59 = por %p57, %p58
      %p61 = scmp.ne.s32.totalorder %s44, %s60
      %p62 = scmp.eq.s32.totalorder %s15, 0
      %p63 = por %p61, %p62
      %s65 = sadd.s32 %s64, 1
      %p68 = scmp.eq.s32.totalorder %s9, 3
      %p69 = scmp.ne.s32.totalorder %s64, %s66
      %p70 = scmp.eq.s32.totalorder %s9, 0
      %p71 = por %p69, %p70
      %p72 = scmp.ne.s32.totalorder %s64, %s66
      %p73 = scmp.eq.s32.totalorder %s14, 3
      %p74 = por %p72, %p73
      %p75 = scmp.ne.s32.totalorder %s66, %s67
      %p76 = scmp.eq.s32.totalorder %s14, 0
      %p77 = por %p75, %p76
      %p78 = scmp.ne.s32.totalorder %s66, %s67
      %p79 = scmp.eq.s32.totalorder %s15, 3
      %p80 = por %p78, %p79
      %p82 = scmp.ne.s32.totalorder %s67, %s81
      %p83 = scmp.eq.s32.totalorder %s15, 0
      %p84 = por %p82, %p83
      %s85 = ssub.s32 %s9, %s16
      %p86 = scmp.eq.s32.totalorder %s85, 0
      %s88 = sadd.s32 %s87, 1
      %s89 = scalar_select %p86, %s87, %s88
      %p92 = pneg %p86
      %p93 = scmp.eq.s32.totalorder %s9, 3
      %p94 = por %p92, %p93
      %p95 = scmp.ne.s32.totalorder %s87, %s90
      %p96 = scmp.eq.s32.totalorder %s9, 0
      %p97 = por %p95, %p96
      %p98 = scmp.ne.s32.totalorder %s87, %s90
      %p99 = scmp.eq.s32.totalorder %s14, 3
      %p100 = por %p98, %p99
      %p101 = scmp.ne.s32.totalorder %s90, %s91
      %p102 = scmp.eq.s32.totalorder %s14, 0
      %p103 = por %p101, %p102
      %p104 = scmp.ne.s32.totalorder %s90, %s91
      %p105 = scmp.eq.s32.totalorder %s15, 3
      %p106 = por %p104, %p105
      %p108 = scmp.ne.s32.totalorder %s91, %s107
      %p109 = scmp.eq.s32.totalorder %s15, 0
      %p110 = por %p108, %p109
      %p111 = scmp.le.s32.totalorder 1, %s9
      %p112 = scmp.lt.s32.totalorder %s9, 5
      %p113 = pnand %p111, %p112
      %p114 = pneg %p113
      // Predicated region
      $region9: #{actor_forward.4} parent=5 // pred_check
        _
      $region10: #{actor_forward.4} parent=5 // pred_check_branch
        %116 = sbr.rel (%p113) target = $region12
      $region11: #{actor_forward.4} parent=5 // pred_region
        %s117 = ssub.s32 %s9, 1
        // Predicated region
        $region13: #{actor_forward.4} parent=11 // pred_check
          %p118 = pneg %p30
        $region14: #{actor_forward.4} parent=11 // pred_check_branch
          %120 = sbr.rel (%p118) target = $region16
        $region15: #{actor_forward.4} parent=11 // pred_region
          _
        $region16: #{actor_forward.4} parent=11 // pred_fallthru
          _
        // Predicated region
        $region17: #{actor_forward.4} parent=11 // pred_check
          %p121 = pneg %p77
        $region18: #{actor_forward.4} parent=11 // pred_check_branch
          %123 = sbr.rel (%p121) target = $region20
        $region19: #{actor_forward.4} parent=11 // pred_region
          _
        $region20: #{actor_forward.4} parent=11 // pred_fallthru
          _
      $region12: #{actor_forward.4} parent=5 // pred_fallthru
        _
      %p124 = scmp.lt.s32.totalorder %s9, 4
      // Predicated region
      $region21: #{actor_forward.4} parent=5 // pred_check
        %p125 = pneg %p124
      $region22: #{actor_forward.4} parent=5 // pred_check_branch
        %127 = sbr.rel (%p125) target = $region24
      $region23: #{actor_forward.4} parent=5 // pred_region
        // Predicated region
        $region25: #{actor_forward.4} parent=23 // pred_check
          %p128 = pneg %p50
        $region26: #{actor_forward.4} parent=23 // pred_check_branch
          %130 = sbr.rel (%p128) target = $region28
        $region27: #{actor_forward.4} parent=23 // pred_region
          %s131 = sand.u32 %s40, 1
          %s132 = sand.u32 %s40, 1
          %s133 = smul.addr %s132, 1408
          %s134 = scalar_lea.vmem [#allocation2], %s133
          %s135 = smul.u32 22, %s9
          %s136 = smul.addr %s135, 8
          %s137 = scalar_lea.vmem %s1, %s136
          // Predicated region
          $region29: #{actor_forward.4} parent=27 // pred_check
            _
          $region30: #{actor_forward.4} parent=27 // pred_check_branch
            %139 = sbr.rel (0) target = $region32
          $region31: #{actor_forward.4} parent=27 // pred_region
            // Predicated region
            $region33: #{actor_forward.4} parent=31 // pred_check
              _
            $region34: #{actor_forward.4} parent=31 // pred_check_branch
              %141 = sbr.rel (0) target = $region36
            $region35: #{actor_forward.4} parent=31 // pred_region
              loop: start=0, step=1, limit=1
              $region37: #{actor_forward.4} parent=35 // loop_pre_header
                _
              $region38: #{actor_forward.4} parent=35 // loop_header
                %s143 = sphi 0, %s147
                %p144 = scmp.ge.s32.totalorder %s143, 1
                %s148 = sphi %s137, %s137
                %s149 = sphi %s134, %s134
              $region39: #{actor_forward.4} parent=35 // loop_header_branch
                %146 = sbr.rel (%p144) target = $region43
              $region40: #{actor_forward.4} parent=35 // loop_body
                %v150 = vld [vmem:[%s148] sm:$0xff]
                %151 = vst [vmem:[%s149] sm:$0xff] %v150
                %v152 = vld [vmem:[%s148 + $0x8] sm:$0xff]
                %153 = vst [vmem:[%s149 + $0x8] sm:$0xff] %v152
                %v154 = vld [vmem:[%s148 + $0x10] sm:$0xff]
                %155 = vst [vmem:[%s149 + $0x10] sm:$0xff] %v154
                %v156 = vld [vmem:[%s148 + $0x18] sm:$0xff]
                %157 = vst [vmem:[%s149 + $0x18] sm:$0xff] %v156
                %v158 = vld [vmem:[%s148 + $0x20] sm:$0xff]
                %159 = vst [vmem:[%s149 + $0x20] sm:$0xff] %v158
                %v160 = vld [vmem:[%s148 + $0x28] sm:$0xff]
                %161 = vst [vmem:[%s149 + $0x28] sm:$0xff] %v160
                %v162 = vld [vmem:[%s148 + $0x30] sm:$0xff]
                %163 = vst [vmem:[%s149 + $0x30] sm:$0xff] %v162
                %v164 = vld [vmem:[%s148 + $0x38] sm:$0xff]
                %165 = vst [vmem:[%s149 + $0x38] sm:$0xff] %v164
                %v166 = vld [vmem:[%s148 + $0x40] sm:$0xff]
                %167 = vst [vmem:[%s149 + $0x40] sm:$0xff] %v166
                %v168 = vld [vmem:[%s148 + $0x48] sm:$0xff]
                %169 = vst [vmem:[%s149 + $0x48] sm:$0xff] %v168
                %v170 = vld [vmem:[%s148 + $0x50] sm:$0xff]
                %171 = vst [vmem:[%s149 + $0x50] sm:$0xff] %v170
                %v172 = vld [vmem:[%s148 + $0x58] sm:$0xff]
                %173 = vst [vmem:[%s149 + $0x58] sm:$0xff] %v172
                %v174 = vld [vmem:[%s148 + $0x60] sm:$0xff]
                %175 = vst [vmem:[%s149 + $0x60] sm:$0xff] %v174
                %v176 = vld [vmem:[%s148 + $0x68] sm:$0xff]
                %177 = vst [vmem:[%s149 + $0x68] sm:$0xff] %v176
                %v178 = vld [vmem:[%s148 + $0x70] sm:$0xff]
                %179 = vst [vmem:[%s149 + $0x70] sm:$0xff] %v178
                %v180 = vld [vmem:[%s148 + $0x78] sm:$0xff]
                %181 = vst [vmem:[%s149 + $0x78] sm:$0xff] %v180
                %v182 = vld [vmem:[%s148 + $0x80] sm:$0xff]
                %183 = vst [vmem:[%s149 + $0x80] sm:$0xff] %v182
                %v184 = vld [vmem:[%s148 + $0x88] sm:$0xff]
                %185 = vst [vmem:[%s149 + $0x88] sm:$0xff] %v184
                %v186 = vld [vmem:[%s148 + $0x90] sm:$0xff]
                %187 = vst [vmem:[%s149 + $0x90] sm:$0xff] %v186
                %v188 = vld [vmem:[%s148 + $0x98] sm:$0xff]
                %189 = vst [vmem:[%s149 + $0x98] sm:$0xff] %v188
                %v190 = vld [vmem:[%s148 + $0xa0] sm:$0xff]
                %191 = vst [vmem:[%s149 + $0xa0] sm:$0xff] %v190
                %v192 = vld [vmem:[%s148 + $0xa8] sm:$0xff]
                %193 = vst [vmem:[%s149 + $0xa8] sm:$0xff] %v192
                %v194 = vld [vmem:[%s148 + $0x2c0] sm:$0xff]
                %195 = vst [vmem:[%s149 + $0xb0] sm:$0xff] %v194
                %v196 = vld [vmem:[%s148 + $0x2c8] sm:$0xff]
                %197 = vst [vmem:[%s149 + $0xb8] sm:$0xff] %v196
                %v198 = vld [vmem:[%s148 + $0x2d0] sm:$0xff]
                %199 = vst [vmem:[%s149 + $0xc0] sm:$0xff] %v198
                %v200 = vld [vmem:[%s148 + $0x2d8] sm:$0xff]
                %201 = vst [vmem:[%s149 + $0xc8] sm:$0xff] %v200
                %v202 = vld [vmem:[%s148 + $0x2e0] sm:$0xff]
                %203 = vst [vmem:[%s149 + $0xd0] sm:$0xff] %v202
                %v204 = vld [vmem:[%s148 + $0x2e8] sm:$0xff]
                %205 = vst [vmem:[%s149 + $0xd8] sm:$0xff] %v204
                %v206 = vld [vmem:[%s148 + $0x2f0] sm:$0xff]
                %207 = vst [vmem:[%s149 + $0xe0] sm:$0xff] %v206
                %v208 = vld [vmem:[%s148 + $0x2f8] sm:$0xff]
                %209 = vst [vmem:[%s149 + $0xe8] sm:$0xff] %v208
                %v210 = vld [vmem:[%s148 + $0x300] sm:$0xff]
                %211 = vst [vmem:[%s149 + $0xf0] sm:$0xff] %v210
                %v212 = vld [vmem:[%s148 + $0x308] sm:$0xff]
                %213 = vst [vmem:[%s149 + $0xf8] sm:$0xff] %v212
                %v214 = vld [vmem:[%s148 + $0x310] sm:$0xff]
                %215 = vst [vmem:[%s149 + $0x100] sm:$0xff] %v214
                %v216 = vld [vmem:[%s148 + $0x318] sm:$0xff]
                %217 = vst [vmem:[%s149 + $0x108] sm:$0xff] %v216
                %v218 = vld [vmem:[%s148 + $0x320] sm:$0xff]
                %219 = vst [vmem:[%s149 + $0x110] sm:$0xff] %v218
                %v220 = vld [vmem:[%s148 + $0x328] sm:$0xff]
                %221 = vst [vmem:[%s149 + $0x118] sm:$0xff] %v220
                %v222 = vld [vmem:[%s148 + $0x330] sm:$0xff]
                %223 = vst [vmem:[%s149 + $0x120] sm:$0xff] %v222
                %v224 = vld [vmem:[%s148 + $0x338] sm:$0xff]
                %225 = vst [vmem:[%s149 + $0x128] sm:$0xff] %v224
                %v226 = vld [vmem:[%s148 + $0x340] sm:$0xff]
                %227 = vst [vmem:[%s149 + $0x130] sm:$0xff] %v226
                %v228 = vld [vmem:[%s148 + $0x348] sm:$0xff]
                %229 = vst [vmem:[%s149 + $0x138] sm:$0xff] %v228
                %v230 = vld [vmem:[%s148 + $0x350] sm:$0xff]
                %231 = vst [vmem:[%s149 + $0x140] sm:$0xff] %v230
                %v232 = vld [vmem:[%s148 + $0x358] sm:$0xff]
                %233 = vst [vmem:[%s149 + $0x148] sm:$0xff] %v232
                %v234 = vld [vmem:[%s148 + $0x360] sm:$0xff]
                %235 = vst [vmem:[%s149 + $0x150] sm:$0xff] %v234
                %v236 = vld [vmem:[%s148 + $0x368] sm:$0xff]
                %237 = vst [vmem:[%s149 + $0x158] sm:$0xff] %v236
                %v238 = vld [vmem:[%s148 + $0x580] sm:$0xff]
                %239 = vst [vmem:[%s149 + $0x160] sm:$0xff] %v238
                %v240 = vld [vmem:[%s148 + $0x588] sm:$0xff]
                %241 = vst [vmem:[%s149 + $0x168] sm:$0xff] %v240
                %v242 = vld [vmem:[%s148 + $0x590] sm:$0xff]
                %243 = vst [vmem:[%s149 + $0x170] sm:$0xff] %v242
                %v244 = vld [vmem:[%s148 + $0x598] sm:$0xff]
                %245 = vst [vmem:[%s149 + $0x178] sm:$0xff] %v244
                %v246 = vld [vmem:[%s148 + $0x5a0] sm:$0xff]
                %247 = vst [vmem:[%s149 + $0x180] sm:$0xff] %v246
                %v248 = vld [vmem:[%s148 + $0x5a8] sm:$0xff]
                %249 = vst [vmem:[%s149 + $0x188] sm:$0xff] %v248
                %v250 = vld [vmem:[%s148 + $0x5b0] sm:$0xff]
                %251 = vst [vmem:[%s149 + $0x190] sm:$0xff] %v250
                %v252 = vld [vmem:[%s148 + $0x5b8] sm:$0xff]
                %253 = vst [vmem:[%s149 + $0x198] sm:$0xff] %v252
                %v254 = vld [vmem:[%s148 + $0x5c0] sm:$0xff]
                %255 = vst [vmem:[%s149 + $0x1a0] sm:$0xff] %v254
                %v256 = vld [vmem:[%s148 + $0x5c8] sm:$0xff]
                %257 = vst [vmem:[%s149 + $0x1a8] sm:$0xff] %v256
                %v258 = vld [vmem:[%s148 + $0x5d0] sm:$0xff]
                %259 = vst [vmem:[%s149 + $0x1b0] sm:$0xff] %v258
                %v260 = vld [vmem:[%s148 + $0x5d8] sm:$0xff]
                %261 = vst [vmem:[%s149 + $0x1b8] sm:$0xff] %v260
                %v262 = vld [vmem:[%s148 + $0x5e0] sm:$0xff]
                %263 = vst [vmem:[%s149 + $0x1c0] sm:$0xff] %v262
                %v264 = vld [vmem:[%s148 + $0x5e8] sm:$0xff]
                %265 = vst [vmem:[%s149 + $0x1c8] sm:$0xff] %v264
                %v266 = vld [vmem:[%s148 + $0x5f0] sm:$0xff]
                %267 = vst [vmem:[%s149 + $0x1d0] sm:$0xff] %v266
                %v268 = vld [vmem:[%s148 + $0x5f8] sm:$0xff]
                %269 = vst [vmem:[%s149 + $0x1d8] sm:$0xff] %v268
                %v270 = vld [vmem:[%s148 + $0x600] sm:$0xff]
                %271 = vst [vmem:[%s149 + $0x1e0] sm:$0xff] %v270
                %v272 = vld [vmem:[%s148 + $0x608] sm:$0xff]
                %273 = vst [vmem:[%s149 + $0x1e8] sm:$0xff] %v272
                %v274 = vld [vmem:[%s148 + $0x610] sm:$0xff]
                %275 = vst [vmem:[%s149 + $0x1f0] sm:$0xff] %v274
                %v276 = vld [vmem:[%s148 + $0x618] sm:$0xff]
                %277 = vst [vmem:[%s149 + $0x1f8] sm:$0xff] %v276
                %v278 = vld [vmem:[%s148 + $0x620] sm:$0xff]
                %279 = vst [vmem:[%s149 + $0x200] sm:$0xff] %v278
                %v280 = vld [vmem:[%s148 + $0x628] sm:$0xff]
                %281 = vst [vmem:[%s149 + $0x208] sm:$0xff] %v280
                %v282 = vld [vmem:[%s148 + $0x840] sm:$0xff]
                %283 = vst [vmem:[%s149 + $0x210] sm:$0xff] %v282
                %v284 = vld [vmem:[%s148 + $0x848] sm:$0xff]
                %285 = vst [vmem:[%s149 + $0x218] sm:$0xff] %v284
                %v286 = vld [vmem:[%s148 + $0x850] sm:$0xff]
                %287 = vst [vmem:[%s149 + $0x220] sm:$0xff] %v286
                %v288 = vld [vmem:[%s148 + $0x858] sm:$0xff]
                %289 = vst [vmem:[%s149 + $0x228] sm:$0xff] %v288
                %v290 = vld [vmem:[%s148 + $0x860] sm:$0xff]
                %291 = vst [vmem:[%s149 + $0x230] sm:$0xff] %v290
                %v292 = vld [vmem:[%s148 + $0x868] sm:$0xff]
                %293 = vst [vmem:[%s149 + $0x238] sm:$0xff] %v292
                %v294 = vld [vmem:[%s148 + $0x870] sm:$0xff]
                %295 = vst [vmem:[%s149 + $0x240] sm:$0xff] %v294
                %v296 = vld [vmem:[%s148 + $0x878] sm:$0xff]
                %297 = vst [vmem:[%s149 + $0x248] sm:$0xff] %v296
                %v298 = vld [vmem:[%s148 + $0x880] sm:$0xff]
                %299 = vst [vmem:[%s149 + $0x250] sm:$0xff] %v298
                %v300 = vld [vmem:[%s148 + $0x888] sm:$0xff]
                %301 = vst [vmem:[%s149 + $0x258] sm:$0xff] %v300
                %v302 = vld [vmem:[%s148 + $0x890] sm:$0xff]
                %303 = vst [vmem:[%s149 + $0x260] sm:$0xff] %v302
                %v304 = vld [vmem:[%s148 + $0x898] sm:$0xff]
                %305 = vst [vmem:[%s149 + $0x268] sm:$0xff] %v304
                %v306 = vld [vmem:[%s148 + $0x8a0] sm:$0xff]
                %307 = vst [vmem:[%s149 + $0x270] sm:$0xff] %v306
                %v308 = vld [vmem:[%s148 + $0x8a8] sm:$0xff]
                %309 = vst [vmem:[%s149 + $0x278] sm:$0xff] %v308
                %v310 = vld [vmem:[%s148 + $0x8b0] sm:$0xff]
                %311 = vst [vmem:[%s149 + $0x280] sm:$0xff] %v310
                %v312 = vld [vmem:[%s148 + $0x8b8] sm:$0xff]
                %313 = vst [vmem:[%s149 + $0x288] sm:$0xff] %v312
                %v314 = vld [vmem:[%s148 + $0x8c0] sm:$0xff]
                %315 = vst [vmem:[%s149 + $0x290] sm:$0xff] %v314
                %v316 = vld [vmem:[%s148 + $0x8c8] sm:$0xff]
                %317 = vst [vmem:[%s149 + $0x298] sm:$0xff] %v316
                %v318 = vld [vmem:[%s148 + $0x8d0] sm:$0xff]
                %319 = vst [vmem:[%s149 + $0x2a0] sm:$0xff] %v318
                %v320 = vld [vmem:[%s148 + $0x8d8] sm:$0xff]
                %321 = vst [vmem:[%s149 + $0x2a8] sm:$0xff] %v320
                %v322 = vld [vmem:[%s148 + $0x8e0] sm:$0xff]
                %323 = vst [vmem:[%s149 + $0x2b0] sm:$0xff] %v322
                %v324 = vld [vmem:[%s148 + $0x8e8] sm:$0xff]
                %325 = vst [vmem:[%s149 + $0x2b8] sm:$0xff] %v324
                %v326 = vld [vmem:[%s148 + $0xb00] sm:$0xff]
                %327 = vst [vmem:[%s149 + $0x2c0] sm:$0xff] %v326
                %v328 = vld [vmem:[%s148 + $0xb08] sm:$0xff]
                %329 = vst [vmem:[%s149 + $0x2c8] sm:$0xff] %v328
                %v330 = vld [vmem:[%s148 + $0xb10] sm:$0xff]
                %331 = vst [vmem:[%s149 + $0x2d0] sm:$0xff] %v330
                %v332 = vld [vmem:[%s148 + $0xb18] sm:$0xff]
                %333 = vst [vmem:[%s149 + $0x2d8] sm:$0xff] %v332
                %v334 = vld [vmem:[%s148 + $0xb20] sm:$0xff]
                %335 = vst [vmem:[%s149 + $0x2e0] sm:$0xff] %v334
                %v336 = vld [vmem:[%s148 + $0xb28] sm:$0xff]
                %337 = vst [vmem:[%s149 + $0x2e8] sm:$0xff] %v336
                %v338 = vld [vmem:[%s148 + $0xb30] sm:$0xff]
                %339 = vst [vmem:[%s149 + $0x2f0] sm:$0xff] %v338
                %v340 = vld [vmem:[%s148 + $0xb38] sm:$0xff]
                %341 = vst [vmem:[%s149 + $0x2f8] sm:$0xff] %v340
                %v342 = vld [vmem:[%s148 + $0xb40] sm:$0xff]
                %343 = vst [vmem:[%s149 + $0x300] sm:$0xff] %v342
                %v344 = vld [vmem:[%s148 + $0xb48] sm:$0xff]
                %345 = vst [vmem:[%s149 + $0x308] sm:$0xff] %v344
                %v346 = vld [vmem:[%s148 + $0xb50] sm:$0xff]
                %347 = vst [vmem:[%s149 + $0x310] sm:$0xff] %v346
                %v348 = vld [vmem:[%s148 + $0xb58] sm:$0xff]
                %349 = vst [vmem:[%s149 + $0x318] sm:$0xff] %v348
                %v350 = vld [vmem:[%s148 + $0xb60] sm:$0xff]
                %351 = vst [vmem:[%s149 + $0x320] sm:$0xff] %v350
                %v352 = vld [vmem:[%s148 + $0xb68] sm:$0xff]
                %353 = vst [vmem:[%s149 + $0x328] sm:$0xff] %v352
                %v354 = vld [vmem:[%s148 + $0xb70] sm:$0xff]
                %355 = vst [vmem:[%s149 + $0x330] sm:$0xff] %v354
                %v356 = vld [vmem:[%s148 + $0xb78] sm:$0xff]
                %357 = vst [vmem:[%s149 + $0x338] sm:$0xff] %v356
                %v358 = vld [vmem:[%s148 + $0xb80] sm:$0xff]
                %359 = vst [vmem:[%s149 + $0x340] sm:$0xff] %v358
                %v360 = vld [vmem:[%s148 + $0xb88] sm:$0xff]
                %361 = vst [vmem:[%s149 + $0x348] sm:$0xff] %v360
                %v362 = vld [vmem:[%s148 + $0xb90] sm:$0xff]
                %363 = vst [vmem:[%s149 + $0x350] sm:$0xff] %v362
                %v364 = vld [vmem:[%s148 + $0xb98] sm:$0xff]
                %365 = vst [vmem:[%s149 + $0x358] sm:$0xff] %v364
                %v366 = vld [vmem:[%s148 + $0xba0] sm:$0xff]
                %367 = vst [vmem:[%s149 + $0x360] sm:$0xff] %v366
                %v368 = vld [vmem:[%s148 + $0xba8] sm:$0xff]
                %369 = vst [vmem:[%s149 + $0x368] sm:$0xff] %v368
                %v370 = vld [vmem:[%s148 + $0xdc0] sm:$0xff]
                %371 = vst [vmem:[%s149 + $0x370] sm:$0xff] %v370
                %v372 = vld [vmem:[%s148 + $0xdc8] sm:$0xff]
                %373 = vst [vmem:[%s149 + $0x378] sm:$0xff] %v372
                %v374 = vld [vmem:[%s148 + $0xdd0] sm:$0xff]
                %375 = vst [vmem:[%s149 + $0x380] sm:$0xff] %v374
                %v376 = vld [vmem:[%s148 + $0xdd8] sm:$0xff]
                %377 = vst [vmem:[%s149 + $0x388] sm:$0xff] %v376
                %v378 = vld [vmem:[%s148 + $0xde0] sm:$0xff]
                %379 = vst [vmem:[%s149 + $0x390] sm:$0xff] %v378
                %v380 = vld [vmem:[%s148 + $0xde8] sm:$0xff]
                %381 = vst [vmem:[%s149 + $0x398] sm:$0xff] %v380
                %v382 = vld [vmem:[%s148 + $0xdf0] sm:$0xff]
                %383 = vst [vmem:[%s149 + $0x3a0] sm:$0xff] %v382
                %v384 = vld [vmem:[%s148 + $0xdf8] sm:$0xff]
                %385 = vst [vmem:[%s149 + $0x3a8] sm:$0xff] %v384
                %v386 = vld [vmem:[%s148 + $0xe00] sm:$0xff]
                %387 = vst [vmem:[%s149 + $0x3b0] sm:$0xff] %v386
                %v388 = vld [vmem:[%s148 + $0xe08] sm:$0xff]
                %389 = vst [vmem:[%s149 + $0x3b8] sm:$0xff] %v388
                %v390 = vld [vmem:[%s148 + $0xe10] sm:$0xff]
                %391 = vst [vmem:[%s149 + $0x3c0] sm:$0xff] %v390
                %v392 = vld [vmem:[%s148 + $0xe18] sm:$0xff]
                %393 = vst [vmem:[%s149 + $0x3c8] sm:$0xff] %v392
                %v394 = vld [vmem:[%s148 + $0xe20] sm:$0xff]
                %395 = vst [vmem:[%s149 + $0x3d0] sm:$0xff] %v394
                %v396 = vld [vmem:[%s148 + $0xe28] sm:$0xff]
                %397 = vst [vmem:[%s149 + $0x3d8] sm:$0xff] %v396
                %v398 = vld [vmem:[%s148 + $0xe30] sm:$0xff]
                %399 = vst [vmem:[%s149 + $0x3e0] sm:$0xff] %v398
                %v400 = vld [vmem:[%s148 + $0xe38] sm:$0xff]
                %401 = vst [vmem:[%s149 + $0x3e8] sm:$0xff] %v400
                %v402 = vld [vmem:[%s148 + $0xe40] sm:$0xff]
                %403 = vst [vmem:[%s149 + $0x3f0] sm:$0xff] %v402
                %v404 = vld [vmem:[%s148 + $0xe48] sm:$0xff]
                %405 = vst [vmem:[%s149 + $0x3f8] sm:$0xff] %v404
                %v406 = vld [vmem:[%s148 + $0xe50] sm:$0xff]
                %407 = vst [vmem:[%s149 + $0x400] sm:$0xff] %v406
                %v408 = vld [vmem:[%s148 + $0xe58] sm:$0xff]
                %409 = vst [vmem:[%s149 + $0x408] sm:$0xff] %v408
                %v410 = vld [vmem:[%s148 + $0xe60] sm:$0xff]
                %411 = vst [vmem:[%s149 + $0x410] sm:$0xff] %v410
                %v412 = vld [vmem:[%s148 + $0xe68] sm:$0xff]
                %413 = vst [vmem:[%s149 + $0x418] sm:$0xff] %v412
                %v414 = vld [vmem:[%s148 + $0x1080] sm:$0xff]
                %415 = vst [vmem:[%s149 + $0x420] sm:$0xff] %v414
                %v416 = vld [vmem:[%s148 + $0x1088] sm:$0xff]
                %417 = vst [vmem:[%s149 + $0x428] sm:$0xff] %v416
                %v418 = vld [vmem:[%s148 + $0x1090] sm:$0xff]
                %419 = vst [vmem:[%s149 + $0x430] sm:$0xff] %v418
                %v420 = vld [vmem:[%s148 + $0x1098] sm:$0xff]
                %421 = vst [vmem:[%s149 + $0x438] sm:$0xff] %v420
                %v422 = vld [vmem:[%s148 + $0x10a0] sm:$0xff]
                %423 = vst [vmem:[%s149 + $0x440] sm:$0xff] %v422
                %v424 = vld [vmem:[%s148 + $0x10a8] sm:$0xff]
                %425 = vst [vmem:[%s149 + $0x448] sm:$0xff] %v424
                %v426 = vld [vmem:[%s148 + $0x10b0] sm:$0xff]
                %427 = vst [vmem:[%s149 + $0x450] sm:$0xff] %v426
                %v428 = vld [vmem:[%s148 + $0x10b8] sm:$0xff]
                %429 = vst [vmem:[%s149 + $0x458] sm:$0xff] %v428
                %v430 = vld [vmem:[%s148 + $0x10c0] sm:$0xff]
                %431 = vst [vmem:[%s149 + $0x460] sm:$0xff] %v430
                %v432 = vld [vmem:[%s148 + $0x10c8] sm:$0xff]
                %433 = vst [vmem:[%s149 + $0x468] sm:$0xff] %v432
                %v434 = vld [vmem:[%s148 + $0x10d0] sm:$0xff]
                %435 = vst [vmem:[%s149 + $0x470] sm:$0xff] %v434
                %v436 = vld [vmem:[%s148 + $0x10d8] sm:$0xff]
                %437 = vst [vmem:[%s149 + $0x478] sm:$0xff] %v436
                %v438 = vld [vmem:[%s148 + $0x10e0] sm:$0xff]
                %439 = vst [vmem:[%s149 + $0x480] sm:$0xff] %v438
                %v440 = vld [vmem:[%s148 + $0x10e8] sm:$0xff]
                %441 = vst [vmem:[%s149 + $0x488] sm:$0xff] %v440
                %v442 = vld [vmem:[%s148 + $0x10f0] sm:$0xff]
                %443 = vst [vmem:[%s149 + $0x490] sm:$0xff] %v442
                %v444 = vld [vmem:[%s148 + $0x10f8] sm:$0xff]
                %445 = vst [vmem:[%s149 + $0x498] sm:$0xff] %v444
                %v446 = vld [vmem:[%s148 + $0x1100] sm:$0xff]
                %447 = vst [vmem:[%s149 + $0x4a0] sm:$0xff] %v446
                %v448 = vld [vmem:[%s148 + $0x1108] sm:$0xff]
                %449 = vst [vmem:[%s149 + $0x4a8] sm:$0xff] %v448
                %v450 = vld [vmem:[%s148 + $0x1110] sm:$0xff]
                %451 = vst [vmem:[%s149 + $0x4b0] sm:$0xff] %v450
                %v452 = vld [vmem:[%s148 + $0x1118] sm:$0xff]
                %453 = vst [vmem:[%s149 + $0x4b8] sm:$0xff] %v452
                %v454 = vld [vmem:[%s148 + $0x1120] sm:$0xff]
                %455 = vst [vmem:[%s149 + $0x4c0] sm:$0xff] %v454
                %v456 = vld [vmem:[%s148 + $0x1128] sm:$0xff]
                %457 = vst [vmem:[%s149 + $0x4c8] sm:$0xff] %v456
                %v458 = vld [vmem:[%s148 + $0x1340] sm:$0xff]
                %459 = vst [vmem:[%s149 + $0x4d0] sm:$0xff] %v458
                %v460 = vld [vmem:[%s148 + $0x1348] sm:$0xff]
                %461 = vst [vmem:[%s149 + $0x4d8] sm:$0xff] %v460
                %v462 = vld [vmem:[%s148 + $0x1350] sm:$0xff]
                %463 = vst [vmem:[%s149 + $0x4e0] sm:$0xff] %v462
                %v464 = vld [vmem:[%s148 + $0x1358] sm:$0xff]
                %465 = vst [vmem:[%s149 + $0x4e8] sm:$0xff] %v464
                %v466 = vld [vmem:[%s148 + $0x1360] sm:$0xff]
                %467 = vst [vmem:[%s149 + $0x4f0] sm:$0xff] %v466
                %v468 = vld [vmem:[%s148 + $0x1368] sm:$0xff]
                %469 = vst [vmem:[%s149 + $0x4f8] sm:$0xff] %v468
                %v470 = vld [vmem:[%s148 + $0x1370] sm:$0xff]
                %471 = vst [vmem:[%s149 + $0x500] sm:$0xff] %v470
                %v472 = vld [vmem:[%s148 + $0x1378] sm:$0xff]
                %473 = vst [vmem:[%s149 + $0x508] sm:$0xff] %v472
                %v474 = vld [vmem:[%s148 + $0x1380] sm:$0xff]
                %475 = vst [vmem:[%s149 + $0x510] sm:$0xff] %v474
                %v476 = vld [vmem:[%s148 + $0x1388] sm:$0xff]
                %477 = vst [vmem:[%s149 + $0x518] sm:$0xff] %v476
                %v478 = vld [vmem:[%s148 + $0x1390] sm:$0xff]
                %479 = vst [vmem:[%s149 + $0x520] sm:$0xff] %v478
                %v480 = vld [vmem:[%s148 + $0x1398] sm:$0xff]
                %481 = vst [vmem:[%s149 + $0x528] sm:$0xff] %v480
                %v482 = vld [vmem:[%s148 + $0x13a0] sm:$0xff]
                %483 = vst [vmem:[%s149 + $0x530] sm:$0xff] %v482
                %v484 = vld [vmem:[%s148 + $0x13a8] sm:$0xff]
                %485 = vst [vmem:[%s149 + $0x538] sm:$0xff] %v484
                %v486 = vld [vmem:[%s148 + $0x13b0] sm:$0xff]
                %487 = vst [vmem:[%s149 + $0x540] sm:$0xff] %v486
                %v488 = vld [vmem:[%s148 + $0x13b8] sm:$0xff]
                %489 = vst [vmem:[%s149 + $0x548] sm:$0xff] %v488
                %v490 = vld [vmem:[%s148 + $0x13c0] sm:$0xff]
                %491 = vst [vmem:[%s149 + $0x550] sm:$0xff] %v490
                %v492 = vld [vmem:[%s148 + $0x13c8] sm:$0xff]
                %493 = vst [vmem:[%s149 + $0x558] sm:$0xff] %v492
                %v494 = vld [vmem:[%s148 + $0x13d0] sm:$0xff]
                %495 = vst [vmem:[%s149 + $0x560] sm:$0xff] %v494
                %v496 = vld [vmem:[%s148 + $0x13d8] sm:$0xff]
                %497 = vst [vmem:[%s149 + $0x568] sm:$0xff] %v496
                %v498 = vld [vmem:[%s148 + $0x13e0] sm:$0xff]
                %499 = vst [vmem:[%s149 + $0x570] sm:$0xff] %v498
                %v500 = vld [vmem:[%s148 + $0x13e8] sm:$0xff]
                %501 = vst [vmem:[%s149 + $0x578] sm:$0xff] %v500
              $region41: #{actor_forward.4} parent=35 // loop_footer
                %s147 = sadd.s32 1, %s143
              $region42: #{actor_forward.4} parent=35 // loop_footer_branch
                %142 = sbr.rel target = $region38
              $region43: #{actor_forward.4} parent=35 // loop_exit
                _
            $region36: #{actor_forward.4} parent=31 // pred_fallthru
              _
            // Predicated region
            $region44: #{actor_forward.4} parent=31 // pred_check
              _
            $region45: #{actor_forward.4} parent=31 // pred_check_branch
              %503 = sbr.rel target = $region47
            $region46: #{actor_forward.4} parent=31 // pred_region
              _
            $region47: #{actor_forward.4} parent=31 // pred_fallthru
              _
          $region32: #{actor_forward.4} parent=27 // pred_fallthru
            _
          %504 = vnop
        $region28: #{actor_forward.4} parent=23 // pred_fallthru
          _
      $region24: #{actor_forward.4} parent=5 // pred_fallthru
        _
      %p505 = scmp.le.s32.totalorder 1, %s9
      %p506 = scmp.lt.s32.totalorder %s9, 5
      %p507 = pnand %p505, %p506
      %p508 = pneg %p507
      // Predicated region
      $region48: #{actor_forward.4} parent=5 // pred_check
        _
      $region49: #{actor_forward.4} parent=5 // pred_check_branch
        %510 = sbr.rel (%p507) target = $region51
      $region50: #{actor_forward.4} parent=5 // pred_region
        %s511 = ssub.s32 %s9, 1
        %s512 = sand.u32 %s43, 1
        %s513 = sand.u32 %s43, 1
        %s514 = smul.addr %s513, 1408
        %s515 = scalar_lea.vmem [#allocation2], %s514
        // Predicated region
        $region52: #{actor_forward.4} parent=50 // pred_check
          %p516 = pneg %p56
        $region53: #{actor_forward.4} parent=50 // pred_check_branch
          %518 = sbr.rel (%p516) target = $region55
        $region54: #{actor_forward.4} parent=50 // pred_region
          _
        $region55: #{actor_forward.4} parent=50 // pred_fallthru
          _
        %p519 = pneg %p30
        %p520 = pneg %p27
        %s521 = sand.u32 %s43, 1
        %s522 = sand.u32 %s43, 1
        %s523 = smul.addr %s522, 1408
        %s524 = scalar_lea.vmem [#allocation2], %s523
        %p525 = pneg %p56
        %p526 = pneg %p53
        %p527 = pneg %p77
        %p528 = pneg %p74
        %p529 = pneg %p103
        %p530 = pneg %p100
        %s531 = smul.u32 22, %s14
        %p532 = scmp.lt.s32.totalorder %s531, 87
        %s533 = scalar_select %p532, %s531, 87
        %s534 = smul.addr %s533, 8
        %s535 = scalar_lea.vmem %s3, %s534
        %s536 = smul.u32 22, %s14
        %s537 = smul.u32 22, %s14
        %p538 = scmp.lt.s32.totalorder %s537, 87
        %s539 = scalar_select %p538, %s537, 87
        %s540 = smul.addr %s539, 8
        %s541 = scalar_lea.vmem %s3, %s540
        %s542 = smul.u32 22, %s14
        %v543 = vld [vmem:[%s0] sm:$0xff]
        %v544 = vld [vmem:[%s515] sm:$0xff]
        %v545 = vld [vmem:[%s515 + $0x8] sm:$0xff]
        %v546 = vld [vmem:[%s515 + $0x10] sm:$0xff]
        %v547 = vld [vmem:[%s515 + $0x18] sm:$0xff]
        %v548 = vld [vmem:[%s515 + $0x20] sm:$0xff]
        %v549 = vld [vmem:[%s515 + $0x28] sm:$0xff]
        %v550 = vld [vmem:[%s515 + $0x30] sm:$0xff]
        %v551 = vld [vmem:[%s515 + $0x38] sm:$0xff]
        %v552 = vld [vmem:[%s515 + $0x40] sm:$0xff]
        %v553 = vld [vmem:[%s515 + $0x48] sm:$0xff]
        %v554 = vld [vmem:[%s515 + $0x50] sm:$0xff]
        %v555 = vld [vmem:[%s515 + $0x58] sm:$0xff]
        %v556 = vld [vmem:[%s515 + $0x60] sm:$0xff]
        %v557 = vld [vmem:[%s515 + $0x68] sm:$0xff]
        %v558 = vld [vmem:[%s515 + $0x70] sm:$0xff]
        %v559 = vld [vmem:[%s515 + $0x78] sm:$0xff]
        %v560 = vld [vmem:[%s515 + $0x80] sm:$0xff]
        %v561 = vld [vmem:[%s515 + $0x88] sm:$0xff]
        %v562 = vld [vmem:[%s515 + $0x90] sm:$0xff]
        %v563 = vld [vmem:[%s515 + $0x98] sm:$0xff]
        %v564 = vld [vmem:[%s515 + $0xa0] sm:$0xff]
        %v565 = vld [vmem:[%s515 + $0xa8] sm:$0xff]
        %v566 = vld [vmem:[%s515 + $0xb0] sm:$0xff]
        %v567 = vld [vmem:[%s515 + $0xb8] sm:$0xff]
        %v568 = vld [vmem:[%s515 + $0xc0] sm:$0xff]
        %v569 = vld [vmem:[%s515 + $0xc8] sm:$0xff]
        %v570 = vld [vmem:[%s515 + $0xd0] sm:$0xff]
        %v571 = vld [vmem:[%s515 + $0xd8] sm:$0xff]
        %v572 = vld [vmem:[%s515 + $0xe0] sm:$0xff]
        %v573 = vld [vmem:[%s515 + $0xe8] sm:$0xff]
        %v574 = vld [vmem:[%s515 + $0xf0] sm:$0xff]
        %v575 = vld [vmem:[%s515 + $0xf8] sm:$0xff]
        %v576 = vld [vmem:[%s515 + $0x100] sm:$0xff]
        %v577 = vld [vmem:[%s515 + $0x108] sm:$0xff]
        %v578 = vld [vmem:[%s515 + $0x110] sm:$0xff]
        %v579 = vld [vmem:[%s515 + $0x118] sm:$0xff]
        %v580 = vld [vmem:[%s515 + $0x120] sm:$0xff]
        %v581 = vld [vmem:[%s515 + $0x128] sm:$0xff]
        %v582 = vld [vmem:[%s515 + $0x130] sm:$0xff]
        %v583 = vld [vmem:[%s515 + $0x138] sm:$0xff]
        %v584 = vld [vmem:[%s515 + $0x140] sm:$0xff]
        %v585 = vld [vmem:[%s515 + $0x148] sm:$0xff]
        %v586 = vld [vmem:[%s515 + $0x150] sm:$0xff]
        %v587 = vld [vmem:[%s515 + $0x158] sm:$0xff]
        %v588 = vld [vmem:[%s515 + $0x160] sm:$0xff]
        %v589 = vld [vmem:[%s515 + $0x168] sm:$0xff]
        %v590 = vld [vmem:[%s515 + $0x170] sm:$0xff]
        %v591 = vld [vmem:[%s515 + $0x178] sm:$0xff]
        %v592 = vld [vmem:[%s515 + $0x180] sm:$0xff]
        %v593 = vld [vmem:[%s515 + $0x188] sm:$0xff]
        %v594 = vld [vmem:[%s515 + $0x190] sm:$0xff]
        %v595 = vld [vmem:[%s515 + $0x198] sm:$0xff]
        %v596 = vld [vmem:[%s515 + $0x1a0] sm:$0xff]
        %v597 = vld [vmem:[%s515 + $0x1a8] sm:$0xff]
        %v598 = vld [vmem:[%s515 + $0x1b0] sm:$0xff]
        %v599 = vld [vmem:[%s515 + $0x1b8] sm:$0xff]
        %v600 = vld [vmem:[%s515 + $0x1c0] sm:$0xff]
        %v601 = vld [vmem:[%s515 + $0x1c8] sm:$0xff]
        %v602 = vld [vmem:[%s515 + $0x1d0] sm:$0xff]
        %v603 = vld [vmem:[%s515 + $0x1d8] sm:$0xff]
        %v604 = vld [vmem:[%s515 + $0x1e0] sm:$0xff]
        %v605 = vld [vmem:[%s515 + $0x1e8] sm:$0xff]
        %v606 = vld [vmem:[%s515 + $0x1f0] sm:$0xff]
        %v607 = vld [vmem:[%s515 + $0x1f8] sm:$0xff]
        %v608 = vld [vmem:[%s515 + $0x200] sm:$0xff]
        %v609 = vld [vmem:[%s515 + $0x208] sm:$0xff]
        %v610 = vld [vmem:[%s515 + $0x210] sm:$0xff]
        %v611 = vld [vmem:[%s515 + $0x218] sm:$0xff]
        %v612 = vld [vmem:[%s515 + $0x220] sm:$0xff]
        %v613 = vld [vmem:[%s515 + $0x228] sm:$0xff]
        %v614 = vld [vmem:[%s515 + $0x230] sm:$0xff]
        %v615 = vld [vmem:[%s515 + $0x238] sm:$0xff]
        %v616 = vld [vmem:[%s515 + $0x240] sm:$0xff]
        %v617 = vld [vmem:[%s515 + $0x248] sm:$0xff]
        %v618 = vld [vmem:[%s515 + $0x250] sm:$0xff]
        %v619 = vld [vmem:[%s515 + $0x258] sm:$0xff]
        %v620 = vld [vmem:[%s515 + $0x260] sm:$0xff]
        %v621 = vld [vmem:[%s515 + $0x268] sm:$0xff]
        %v622 = vld [vmem:[%s515 + $0x270] sm:$0xff]
        %v623 = vld [vmem:[%s515 + $0x278] sm:$0xff]
        %v624 = vld [vmem:[%s515 + $0x280] sm:$0xff]
        %v625 = vld [vmem:[%s515 + $0x288] sm:$0xff]
        %v626 = vld [vmem:[%s515 + $0x290] sm:$0xff]
        %v627 = vld [vmem:[%s515 + $0x298] sm:$0xff]
        %v628 = vld [vmem:[%s515 + $0x2a0] sm:$0xff]
        %v629 = vld [vmem:[%s515 + $0x2a8] sm:$0xff]
        %v630 = vld [vmem:[%s515 + $0x2b0] sm:$0xff]
        %v631 = vld [vmem:[%s515 + $0x2b8] sm:$0xff]
        %v632 = vld [vmem:[%s515 + $0x2c0] sm:$0xff]
        %v633 = vld [vmem:[%s515 + $0x2c8] sm:$0xff]
        %v634 = vld [vmem:[%s515 + $0x2d0] sm:$0xff]
        %v635 = vld [vmem:[%s515 + $0x2d8] sm:$0xff]
        %v636 = vld [vmem:[%s515 + $0x2e0] sm:$0xff]
        %v637 = vld [vmem:[%s515 + $0x2e8] sm:$0xff]
        %v638 = vld [vmem:[%s515 + $0x2f0] sm:$0xff]
        %v639 = vld [vmem:[%s515 + $0x2f8] sm:$0xff]
        %v640 = vld [vmem:[%s515 + $0x300] sm:$0xff]
        %v641 = vld [vmem:[%s515 + $0x308] sm:$0xff]
        %v642 = vld [vmem:[%s515 + $0x310] sm:$0xff]
        %v643 = vld [vmem:[%s515 + $0x318] sm:$0xff]
        %v644 = vld [vmem:[%s515 + $0x320] sm:$0xff]
        %v645 = vld [vmem:[%s515 + $0x328] sm:$0xff]
        %v646 = vld [vmem:[%s515 + $0x330] sm:$0xff]
        %v647 = vld [vmem:[%s515 + $0x338] sm:$0xff]
        %v648 = vld [vmem:[%s515 + $0x340] sm:$0xff]
        %v649 = vld [vmem:[%s515 + $0x348] sm:$0xff]
        %v650 = vld [vmem:[%s515 + $0x350] sm:$0xff]
        %v651 = vld [vmem:[%s515 + $0x358] sm:$0xff]
        %v652 = vld [vmem:[%s515 + $0x360] sm:$0xff]
        %v653 = vld [vmem:[%s515 + $0x368] sm:$0xff]
        %v654 = vld [vmem:[%s515 + $0x370] sm:$0xff]
        %v655 = vld [vmem:[%s515 + $0x378] sm:$0xff]
        %v656 = vld [vmem:[%s515 + $0x380] sm:$0xff]
        %v657 = vld [vmem:[%s515 + $0x388] sm:$0xff]
        %v658 = vld [vmem:[%s515 + $0x390] sm:$0xff]
        %v659 = vld [vmem:[%s515 + $0x398] sm:$0xff]
        %v660 = vld [vmem:[%s515 + $0x3a0] sm:$0xff]
        %v661 = vld [vmem:[%s515 + $0x3a8] sm:$0xff]
        %v662 = vld [vmem:[%s515 + $0x3b0] sm:$0xff]
        %v663 = vld [vmem:[%s515 + $0x3b8] sm:$0xff]
        %v664 = vld [vmem:[%s515 + $0x3c0] sm:$0xff]
        %v665 = vld [vmem:[%s515 + $0x3c8] sm:$0xff]
        %v666 = vld [vmem:[%s515 + $0x3d0] sm:$0xff]
        %v667 = vld [vmem:[%s515 + $0x3d8] sm:$0xff]
        %v668 = vld [vmem:[%s515 + $0x3e0] sm:$0xff]
        %v669 = vld [vmem:[%s515 + $0x3e8] sm:$0xff]
        %v670 = vld [vmem:[%s515 + $0x3f0] sm:$0xff]
        %v671 = vld [vmem:[%s515 + $0x3f8] sm:$0xff]
        %v672 = vld [vmem:[%s515 + $0x400] sm:$0xff]
        %v673 = vld [vmem:[%s515 + $0x408] sm:$0xff]
        %v674 = vld [vmem:[%s515 + $0x410] sm:$0xff]
        %v675 = vld [vmem:[%s515 + $0x418] sm:$0xff]
        %v676 = vld [vmem:[%s515 + $0x420] sm:$0xff]
        %v677 = vld [vmem:[%s515 + $0x428] sm:$0xff]
        %v678 = vld [vmem:[%s515 + $0x430] sm:$0xff]
        %v679 = vld [vmem:[%s515 + $0x438] sm:$0xff]
        %v680 = vld [vmem:[%s515 + $0x440] sm:$0xff]
        %v681 = vld [vmem:[%s515 + $0x448] sm:$0xff]
        %v682 = vld [vmem:[%s515 + $0x450] sm:$0xff]
        %v683 = vld [vmem:[%s515 + $0x458] sm:$0xff]
        %v684 = vld [vmem:[%s515 + $0x460] sm:$0xff]
        %v685 = vld [vmem:[%s515 + $0x468] sm:$0xff]
        %v686 = vld [vmem:[%s515 + $0x470] sm:$0xff]
        %v687 = vld [vmem:[%s515 + $0x478] sm:$0xff]
        %v688 = vld [vmem:[%s515 + $0x480] sm:$0xff]
        %v689 = vld [vmem:[%s515 + $0x488] sm:$0xff]
        %v690 = vld [vmem:[%s515 + $0x490] sm:$0xff]
        %v691 = vld [vmem:[%s515 + $0x498] sm:$0xff]
        %v692 = vld [vmem:[%s515 + $0x4a0] sm:$0xff]
        %v693 = vld [vmem:[%s515 + $0x4a8] sm:$0xff]
        %v694 = vld [vmem:[%s515 + $0x4b0] sm:$0xff]
        %v695 = vld [vmem:[%s515 + $0x4b8] sm:$0xff]
        %v696 = vld [vmem:[%s515 + $0x4c0] sm:$0xff]
        %v697 = vld [vmem:[%s515 + $0x4c8] sm:$0xff]
        %v698 = vld [vmem:[%s515 + $0x4d0] sm:$0xff]
        %v699 = vld [vmem:[%s515 + $0x4d8] sm:$0xff]
        %v700 = vld [vmem:[%s515 + $0x4e0] sm:$0xff]
        %v701 = vld [vmem:[%s515 + $0x4e8] sm:$0xff]
        %v702 = vld [vmem:[%s515 + $0x4f0] sm:$0xff]
        %v703 = vld [vmem:[%s515 + $0x4f8] sm:$0xff]
        %v704 = vld [vmem:[%s515 + $0x500] sm:$0xff]
        %v705 = vld [vmem:[%s515 + $0x508] sm:$0xff]
        %v706 = vld [vmem:[%s515 + $0x510] sm:$0xff]
        %v707 = vld [vmem:[%s515 + $0x518] sm:$0xff]
        %v708 = vld [vmem:[%s515 + $0x520] sm:$0xff]
        %v709 = vld [vmem:[%s515 + $0x528] sm:$0xff]
        %v710 = vld [vmem:[%s515 + $0x530] sm:$0xff]
        %v711 = vld [vmem:[%s515 + $0x538] sm:$0xff]
        %v712 = vld [vmem:[%s515 + $0x540] sm:$0xff]
        %v713 = vld [vmem:[%s515 + $0x548] sm:$0xff]
        %v714 = vld [vmem:[%s515 + $0x550] sm:$0xff]
        %v715 = vld [vmem:[%s515 + $0x558] sm:$0xff]
        %v716 = vld [vmem:[%s515 + $0x560] sm:$0xff]
        %v717 = vld [vmem:[%s515 + $0x568] sm:$0xff]
        %v718 = vld [vmem:[%s515 + $0x570] sm:$0xff]
        %v719 = vld [vmem:[%s515 + $0x578] sm:$0xff]
        %v720 = vld [vmem:[%s2] sm:$0xff]
        %722 = vset.pattern.permute.xlu0 0
        %723 = vperm.xlu0 %722, %v720
        %v724 = vpop.permute.xlu0 %723
        %vm726 = vcmask 523264
        %v728 = vsel %vm726, %v543, 0
        %730 = vmatprep.subr.mxu0 0.0
        %731 = vmatpush1.msra.mxu0 0.0
        %732 = vmatprep.subr.mxu0 0.0
        %733 = vmatpush1.msra.mxu0 0.0
        %734 = vmatprep.subr.mxu0 0.0
        %735 = vmatpush1.msra.mxu0 0.0
        %736 = vmatprep.subr.mxu0 0.0
        %737 = vmatpush1.msra.mxu0 0.0
        %738 = vmatprep.subr.mxu0 0.0
        %739 = vmatpush1.msra.mxu0 0.0
        %740 = vmatprep.subr.mxu0 0.0
        %741 = vmatpush1.msra.mxu0 0.0
        %742 = vmatprep.subr.mxu0 0.0
        %743 = vmatpush1.msra.mxu0 0.0
        %744 = vmatprep.subr.mxu0 0.0
        %745 = vmatpush1.msra.mxu0 0.0
        %746 = vmatprep.subr.mxu0 %v699
        %747 = vmatpush1.msra.mxu0 %v698
        %748 = vmatprep.subr.mxu0 %v677
        %749 = vmatpush1.msra.mxu0 %v676
        %750 = vmatprep.subr.mxu0 %v655
        %751 = vmatpush1.msra.mxu0 %v654
        %752 = vmatprep.subr.mxu0 %v633
        %753 = vmatpush1.msra.mxu0 %v632
        %754 = vmatprep.subr.mxu0 %v611
        %755 = vmatpush1.msra.mxu0 %v610
        %756 = vmatprep.subr.mxu0 %v589
        %757 = vmatpush1.msra.mxu0 %v588
        %758 = vmatprep.subr.mxu0 %v567
        %759 = vmatpush1.msra.mxu0 %v566
        %760 = vmatprep.subr.mxu0 %v545
        %761 = vmatpush1.msra.mxu0 %v544
        %762 = vmatprep.subr.mxu0 0.0
        %763 = vmatpush2.msra.mxu0 0.0
        %764 = vmatprep.subr.mxu0 0.0
        %765 = vmatpush2.msra.mxu0 0.0
        %766 = vmatprep.subr.mxu0 0.0
        %767 = vmatpush2.msra.mxu0 0.0
        %768 = vmatprep.subr.mxu0 0.0
        %769 = vmatpush2.msra.mxu0 0.0
        %770 = vmatprep.subr.mxu0 0.0
        %771 = vmatpush2.msra.mxu0 0.0
        %772 = vmatprep.subr.mxu0 0.0
        %773 = vmatpush2.msra.mxu0 0.0
        %774 = vmatprep.subr.mxu0 0.0
        %775 = vmatpush2.msra.mxu0 0.0
        %776 = vmatprep.subr.mxu0 0.0
        %777 = vmatpush2.msra.mxu0 0.0
        %778 = vmatprep.subr.mxu0 0.0
        %779 = vmatpush2.msra.mxu0 0.0
        %780 = vmatprep.subr.mxu0 0.0
        %781 = vmatpush2.msra.mxu0 0.0
        %782 = vmatprep.subr.mxu0 0.0
        %783 = vmatpush2.msra.mxu0 0.0
        %784 = vmatprep.subr.mxu0 0.0
        %785 = vmatpush2.msra.mxu0 0.0
        %786 = vmatprep.subr.mxu0 0.0
        %787 = vmatpush2.msra.mxu0 0.0
        %788 = vmatprep.subr.mxu0 0.0
        %789 = vmatpush2.msra.mxu0 0.0
        %790 = vmatprep.subr.mxu0 0.0
        %791 = vmatpush2.msra.mxu0 0.0
        %792 = vmatprep.subr.mxu0 0.0
        %793 = vmatpush2.msra.mxu0 0.0
        %794 = vmatprep.mubr.f32.mxu0 0.0
        %795 = vmatmul.mubr.f32.gmra.mxu0 %v728
        %v796 = vpop.f32.mrf.mxu0
        %v797 = vadd.f32 %v724, %v796
        %v798 = vpop.f32.mrf.mxu0
        %v799 = vadd.f32 %v724, %v798
        %800 = vdwg.mxu0
        %801 = vmatprep.subr.mxu0 0.0
        %802 = vmatpush1.msra.mxu0 0.0
        %803 = vmatprep.subr.mxu0 0.0
        %804 = vmatpush1.msra.mxu0 0.0
        %805 = vmatprep.subr.mxu0 0.0
        %806 = vmatpush1.msra.mxu0 0.0
        %807 = vmatprep.subr.mxu0 0.0
        %808 = vmatpush1.msra.mxu0 0.0
        %809 = vmatprep.subr.mxu0 0.0
        %810 = vmatpush1.msra.mxu0 0.0
        %811 = vmatprep.subr.mxu0 0.0
        %812 = vmatpush1.msra.mxu0 0.0
        %813 = vmatprep.subr.mxu0 0.0
        %814 = vmatpush1.msra.mxu0 0.0
        %815 = vmatprep.subr.mxu0 0.0
        %816 = vmatpush1.msra.mxu0 0.0
        %817 = vmatprep.subr.mxu0 %v701
        %818 = vmatpush1.msra.mxu0 %v700
        %819 = vmatprep.subr.mxu0 %v679
        %820 = vmatpush1.msra.mxu0 %v678
        %821 = vmatprep.subr.mxu0 %v657
        %822 = vmatpush1.msra.mxu0 %v656
        %823 = vmatprep.subr.mxu0 %v635
        %824 = vmatpush1.msra.mxu0 %v634
        %825 = vmatprep.subr.mxu0 %v613
        %826 = vmatpush1.msra.mxu0 %v612
        %827 = vmatprep.subr.mxu0 %v591
        %828 = vmatpush1.msra.mxu0 %v590
        %829 = vmatprep.subr.mxu0 %v569
        %830 = vmatpush1.msra.mxu0 %v568
        %831 = vmatprep.subr.mxu0 %v547
        %832 = vmatpush1.msra.mxu0 %v546
        %833 = vmatprep.subr.mxu0 0.0
        %834 = vmatpush2.msra.mxu0 0.0
        %835 = vmatprep.subr.mxu0 0.0
        %836 = vmatpush2.msra.mxu0 0.0
        %837 = vmatprep.subr.mxu0 0.0
        %838 = vmatpush2.msra.mxu0 0.0
        %839 = vmatprep.subr.mxu0 0.0
        %840 = vmatpush2.msra.mxu0 0.0
        %841 = vmatprep.subr.mxu0 0.0
        %842 = vmatpush2.msra.mxu0 0.0
        %843 = vmatprep.subr.mxu0 0.0
        %844 = vmatpush2.msra.mxu0 0.0
        %845 = vmatprep.subr.mxu0 0.0
        %846 = vmatpush2.msra.mxu0 0.0
        %847 = vmatprep.subr.mxu0 0.0
        %848 = vmatpush2.msra.mxu0 0.0
        %849 = vmatprep.subr.mxu0 0.0
        %850 = vmatpush2.msra.mxu0 0.0
        %851 = vmatprep.subr.mxu0 0.0
        %852 = vmatpush2.msra.mxu0 0.0
        %853 = vmatprep.subr.mxu0 0.0
        %854 = vmatpush2.msra.mxu0 0.0
        %855 = vmatprep.subr.mxu0 0.0
        %856 = vmatpush2.msra.mxu0 0.0
        %857 = vmatprep.subr.mxu0 0.0
        %858 = vmatpush2.msra.mxu0 0.0
        %859 = vmatprep.subr.mxu0 0.0
        %860 = vmatpush2.msra.mxu0 0.0
        %861 = vmatprep.subr.mxu0 0.0
        %862 = vmatpush2.msra.mxu0 0.0
        %863 = vmatprep.subr.mxu0 0.0
        %864 = vmatpush2.msra.mxu0 0.0
        %865 = vmatprep.mubr.f32.mxu0 0.0
        %866 = vmatmul.mubr.f32.gmra.mxu0 %v728
        %v867 = vpop.f32.mrf.mxu0
        %v868 = vadd.f32 %v724, %v867
        %v869 = vpop.f32.mrf.mxu0
        %v870 = vadd.f32 %v724, %v869
        %871 = vdwg.mxu0
        %872 = vmatprep.subr.mxu0 0.0
        %873 = vmatpush1.msra.mxu0 0.0
        %874 = vmatprep.subr.mxu0 0.0
        %875 = vmatpush1.msra.mxu0 0.0
        %876 = vmatprep.subr.mxu0 0.0
        %877 = vmatpush1.msra.mxu0 0.0
        %878 = vmatprep.subr.mxu0 0.0
        %879 = vmatpush1.msra.mxu0 0.0
        %880 = vmatprep.subr.mxu0 0.0
        %881 = vmatpush1.msra.mxu0 0.0
        %882 = vmatprep.subr.mxu0 0.0
        %883 = vmatpush1.msra.mxu0 0.0
        %884 = vmatprep.subr.mxu0 0.0
        %885 = vmatpush1.msra.mxu0 0.0
        %886 = vmatprep.subr.mxu0 0.0
        %887 = vmatpush1.msra.mxu0 0.0
        %888 = vmatprep.subr.mxu0 %v703
        %889 = vmatpush1.msra.mxu0 %v702
        %890 = vmatprep.subr.mxu0 %v681
        %891 = vmatpush1.msra.mxu0 %v680
        %892 = vmatprep.subr.mxu0 %v659
        %893 = vmatpush1.msra.mxu0 %v658
        %894 = vmatprep.subr.mxu0 %v637
        %895 = vmatpush1.msra.mxu0 %v636
        %896 = vmatprep.subr.mxu0 %v615
        %897 = vmatpush1.msra.mxu0 %v614
        %898 = vmatprep.subr.mxu0 %v593
        %899 = vmatpush1.msra.mxu0 %v592
        %900 = vmatprep.subr.mxu0 %v571
        %901 = vmatpush1.msra.mxu0 %v570
        %902 = vmatprep.subr.mxu0 %v549
        %903 = vmatpush1.msra.mxu0 %v548
        %904 = vmatprep.subr.mxu0 0.0
        %905 = vmatpush2.msra.mxu0 0.0
        %906 = vmatprep.subr.mxu0 0.0
        %907 = vmatpush2.msra.mxu0 0.0
        %908 = vmatprep.subr.mxu0 0.0
        %909 = vmatpush2.msra.mxu0 0.0
        %910 = vmatprep.subr.mxu0 0.0
        %911 = vmatpush2.msra.mxu0 0.0
        %912 = vmatprep.subr.mxu0 0.0
        %913 = vmatpush2.msra.mxu0 0.0
        %914 = vmatprep.subr.mxu0 0.0
        %915 = vmatpush2.msra.mxu0 0.0
        %916 = vmatprep.subr.mxu0 0.0
        %917 = vmatpush2.msra.mxu0 0.0
        %918 = vmatprep.subr.mxu0 0.0
        %919 = vmatpush2.msra.mxu0 0.0
        %920 = vmatprep.subr.mxu0 0.0
        %921 = vmatpush2.msra.mxu0 0.0
        %922 = vmatprep.subr.mxu0 0.0
        %923 = vmatpush2.msra.mxu0 0.0
        %924 = vmatprep.subr.mxu0 0.0
        %925 = vmatpush2.msra.mxu0 0.0
        %926 = vmatprep.subr.mxu0 0.0
        %927 = vmatpush2.msra.mxu0 0.0
        %928 = vmatprep.subr.mxu0 0.0
        %929 = vmatpush2.msra.mxu0 0.0
        %930 = vmatprep.subr.mxu0 0.0
        %931 = vmatpush2.msra.mxu0 0.0
        %932 = vmatprep.subr.mxu0 0.0
        %933 = vmatpush2.msra.mxu0 0.0
        %934 = vmatprep.subr.mxu0 0.0
        %935 = vmatpush2.msra.mxu0 0.0
        %936 = vmatprep.mubr.f32.mxu0 0.0
        %937 = vmatmul.mubr.f32.gmra.mxu0 %v728
        %v938 = vpop.f32.mrf.mxu0
        %v939 = vadd.f32 %v724, %v938
        %v940 = vpop.f32.mrf.mxu0
        %v941 = vadd.f32 %v724, %v940
        %942 = vdwg.mxu0
        %943 = vmatprep.subr.mxu0 0.0
        %944 = vmatpush1.msra.mxu0 0.0
        %945 = vmatprep.subr.mxu0 0.0
        %946 = vmatpush1.msra.mxu0 0.0
        %947 = vmatprep.subr.mxu0 0.0
        %948 = vmatpush1.msra.mxu0 0.0
        %949 = vmatprep.subr.mxu0 0.0
        %950 = vmatpush1.msra.mxu0 0.0
        %951 = vmatprep.subr.mxu0 0.0
        %952 = vmatpush1.msra.mxu0 0.0
        %953 = vmatprep.subr.mxu0 0.0
        %954 = vmatpush1.msra.mxu0 0.0
        %955 = vmatprep.subr.mxu0 0.0
        %956 = vmatpush1.msra.mxu0 0.0
        %957 = vmatprep.subr.mxu0 0.0
        %958 = vmatpush1.msra.mxu0 0.0
        %959 = vmatprep.subr.mxu0 %v705
        %960 = vmatpush1.msra.mxu0 %v704
        %961 = vmatprep.subr.mxu0 %v683
        %962 = vmatpush1.msra.mxu0 %v682
        %963 = vmatprep.subr.mxu0 %v661
        %964 = vmatpush1.msra.mxu0 %v660
        %965 = vmatprep.subr.mxu0 %v639
        %966 = vmatpush1.msra.mxu0 %v638
        %967 = vmatprep.subr.mxu0 %v617
        %968 = vmatpush1.msra.mxu0 %v616
        %969 = vmatprep.subr.mxu0 %v595
        %970 = vmatpush1.msra.mxu0 %v594
        %971 = vmatprep.subr.mxu0 %v573
        %972 = vmatpush1.msra.mxu0 %v572
        %973 = vmatprep.subr.mxu0 %v551
        %974 = vmatpush1.msra.mxu0 %v550
        %975 = vmatprep.subr.mxu0 0.0
        %976 = vmatpush2.msra.mxu0 0.0
        %977 = vmatprep.subr.mxu0 0.0
        %978 = vmatpush2.msra.mxu0 0.0
        %979 = vmatprep.subr.mxu0 0.0
        %980 = vmatpush2.msra.mxu0 0.0
        %981 = vmatprep.subr.mxu0 0.0
        %982 = vmatpush2.msra.mxu0 0.0
        %983 = vmatprep.subr.mxu0 0.0
        %984 = vmatpush2.msra.mxu0 0.0
        %985 = vmatprep.subr.mxu0 0.0
        %986 = vmatpush2.msra.mxu0 0.0
        %987 = vmatprep.subr.mxu0 0.0
        %988 = vmatpush2.msra.mxu0 0.0
        %989 = vmatprep.subr.mxu0 0.0
        %990 = vmatpush2.msra.mxu0 0.0
        %991 = vmatprep.subr.mxu0 0.0
        %992 = vmatpush2.msra.mxu0 0.0
        %993 = vmatprep.subr.mxu0 0.0
        %994 = vmatpush2.msra.mxu0 0.0
        %995 = vmatprep.subr.mxu0 0.0
        %996 = vmatpush2.msra.mxu0 0.0
        %997 = vmatprep.subr.mxu0 0.0
        %998 = vmatpush2.msra.mxu0 0.0
        %999 = vmatprep.subr.mxu0 0.0
        %1000 = vmatpush2.msra.mxu0 0.0
        %1001 = vmatprep.subr.mxu0 0.0
        %1002 = vmatpush2.msra.mxu0 0.0
        %1003 = vmatprep.subr.mxu0 0.0
        %1004 = vmatpush2.msra.mxu0 0.0
        %1005 = vmatprep.subr.mxu0 0.0
        %1006 = vmatpush2.msra.mxu0 0.0
        %1007 = vmatprep.mubr.f32.mxu0 0.0
        %1008 = vmatmul.mubr.f32.gmra.mxu0 %v728
        %v1009 = vpop.f32.mrf.mxu0
        %v1010 = vadd.f32 %v724, %v1009
        %v1011 = vpop.f32.mrf.mxu0
        %v1012 = vadd.f32 %v724, %v1011
        %1013 = vdwg.mxu0
        %1014 = vmatprep.subr.mxu0 0.0
        %1015 = vmatpush1.msra.mxu0 0.0
        %1016 = vmatprep.subr.mxu0 0.0
        %1017 = vmatpush1.msra.mxu0 0.0
        %1018 = vmatprep.subr.mxu0 0.0
        %1019 = vmatpush1.msra.mxu0 0.0
        %1020 = vmatprep.subr.mxu0 0.0
        %1021 = vmatpush1.msra.mxu0 0.0
        %1022 = vmatprep.subr.mxu0 0.0
        %1023 = vmatpush1.msra.mxu0 0.0
        %1024 = vmatprep.subr.mxu0 0.0
        %1025 = vmatpush1.msra.mxu0 0.0
        %1026 = vmatprep.subr.mxu0 0.0
        %1027 = vmatpush1.msra.mxu0 0.0
        %1028 = vmatprep.subr.mxu0 0.0
        %1029 = vmatpush1.msra.mxu0 0.0
        %1030 = vmatprep.subr.mxu0 %v707
        %1031 = vmatpush1.msra.mxu0 %v706
        %1032 = vmatprep.subr.mxu0 %v685
        %1033 = vmatpush1.msra.mxu0 %v684
        %1034 = vmatprep.subr.mxu0 %v663
        %1035 = vmatpush1.msra.mxu0 %v662
        %1036 = vmatprep.subr.mxu0 %v641
        %1037 = vmatpush1.msra.mxu0 %v640
        %1038 = vmatprep.subr.mxu0 %v619
        %1039 = vmatpush1.msra.mxu0 %v618
        %1040 = vmatprep.subr.mxu0 %v597
        %1041 = vmatpush1.msra.mxu0 %v596
        %1042 = vmatprep.subr.mxu0 %v575
        %1043 = vmatpush1.msra.mxu0 %v574
        %1044 = vmatprep.subr.mxu0 %v553
        %1045 = vmatpush1.msra.mxu0 %v552
        %1046 = vmatprep.subr.mxu0 0.0
        %1047 = vmatpush2.msra.mxu0 0.0
        %1048 = vmatprep.subr.mxu0 0.0
        %1049 = vmatpush2.msra.mxu0 0.0
        %1050 = vmatprep.subr.mxu0 0.0
        %1051 = vmatpush2.msra.mxu0 0.0
        %1052 = vmatprep.subr.mxu0 0.0
        %1053 = vmatpush2.msra.mxu0 0.0
        %1054 = vmatprep.subr.mxu0 0.0
        %1055 = vmatpush2.msra.mxu0 0.0
        %1056 = vmatprep.subr.mxu0 0.0
        %1057 = vmatpush2.msra.mxu0 0.0
        %1058 = vmatprep.subr.mxu0 0.0
        %1059 = vmatpush2.msra.mxu0 0.0
        %1060 = vmatprep.subr.mxu0 0.0
        %1061 = vmatpush2.msra.mxu0 0.0
        %1062 = vmatprep.subr.mxu0 0.0
        %1063 = vmatpush2.msra.mxu0 0.0
        %1064 = vmatprep.subr.mxu0 0.0
        %1065 = vmatpush2.msra.mxu0 0.0
        %1066 = vmatprep.subr.mxu0 0.0
        %1067 = vmatpush2.msra.mxu0 0.0
        %1068 = vmatprep.subr.mxu0 0.0
        %1069 = vmatpush2.msra.mxu0 0.0
        %1070 = vmatprep.subr.mxu0 0.0
        %1071 = vmatpush2.msra.mxu0 0.0
        %1072 = vmatprep.subr.mxu0 0.0
        %1073 = vmatpush2.msra.mxu0 0.0
        %1074 = vmatprep.subr.mxu0 0.0
        %1075 = vmatpush2.msra.mxu0 0.0
        %1076 = vmatprep.subr.mxu0 0.0
        %1077 = vmatpush2.msra.mxu0 0.0
        %1078 = vmatprep.mubr.f32.mxu0 0.0
        %1079 = vmatmul.mubr.f32.gmra.mxu0 %v728
        %v1080 = vpop.f32.mrf.mxu0
        %v1081 = vadd.f32 %v724, %v1080
        %v1082 = vpop.f32.mrf.mxu0
        %v1083 = vadd.f32 %v724, %v1082
        %1084 = vdwg.mxu0
        %1085 = vmatprep.subr.mxu0 0.0
        %1086 = vmatpush1.msra.mxu0 0.0
        %1087 = vmatprep.subr.mxu0 0.0
        %1088 = vmatpush1.msra.mxu0 0.0
        %1089 = vmatprep.subr.mxu0 0.0
        %1090 = vmatpush1.msra.mxu0 0.0
        %1091 = vmatprep.subr.mxu0 0.0
        %1092 = vmatpush1.msra.mxu0 0.0
        %1093 = vmatprep.subr.mxu0 0.0
        %1094 = vmatpush1.msra.mxu0 0.0
        %1095 = vmatprep.subr.mxu0 0.0
        %1096 = vmatpush1.msra.mxu0 0.0
        %1097 = vmatprep.subr.mxu0 0.0
        %1098 = vmatpush1.msra.mxu0 0.0
        %1099 = vmatprep.subr.mxu0 0.0
        %1100 = vmatpush1.msra.mxu0 0.0
        %1101 = vmatprep.subr.mxu0 %v709
        %1102 = vmatpush1.msra.mxu0 %v708
        %1103 = vmatprep.subr.mxu0 %v687
        %1104 = vmatpush1.msra.mxu0 %v686
        %1105 = vmatprep.subr.mxu0 %v665
        %1106 = vmatpush1.msra.mxu0 %v664
        %1107 = vmatprep.subr.mxu0 %v643
        %1108 = vmatpush1.msra.mxu0 %v642
        %1109 = vmatprep.subr.mxu0 %v621
        %1110 = vmatpush1.msra.mxu0 %v620
        %1111 = vmatprep.subr.mxu0 %v599
        %1112 = vmatpush1.msra.mxu0 %v598
        %1113 = vmatprep.subr.mxu0 %v577
        %1114 = vmatpush1.msra.mxu0 %v576
        %1115 = vmatprep.subr.mxu0 %v555
        %1116 = vmatpush1.msra.mxu0 %v554
        %1117 = vmatprep.subr.mxu0 0.0
        %1118 = vmatpush2.msra.mxu0 0.0
        %1119 = vmatprep.subr.mxu0 0.0
        %1120 = vmatpush2.msra.mxu0 0.0
        %1121 = vmatprep.subr.mxu0 0.0
        %1122 = vmatpush2.msra.mxu0 0.0
        %1123 = vmatprep.subr.mxu0 0.0
        %1124 = vmatpush2.msra.mxu0 0.0
        %1125 = vmatprep.subr.mxu0 0.0
        %1126 = vmatpush2.msra.mxu0 0.0
        %1127 = vmatprep.subr.mxu0 0.0
        %1128 = vmatpush2.msra.mxu0 0.0
        %1129 = vmatprep.subr.mxu0 0.0
        %1130 = vmatpush2.msra.mxu0 0.0
        %1131 = vmatprep.subr.mxu0 0.0
        %1132 = vmatpush2.msra.mxu0 0.0
        %1133 = vmatprep.subr.mxu0 0.0
        %1134 = vmatpush2.msra.mxu0 0.0
        %1135 = vmatprep.subr.mxu0 0.0
        %1136 = vmatpush2.msra.mxu0 0.0
        %1137 = vmatprep.subr.mxu0 0.0
        %1138 = vmatpush2.msra.mxu0 0.0
        %1139 = vmatprep.subr.mxu0 0.0
        %1140 = vmatpush2.msra.mxu0 0.0
        %1141 = vmatprep.subr.mxu0 0.0
        %1142 = vmatpush2.msra.mxu0 0.0
        %1143 = vmatprep.subr.mxu0 0.0
        %1144 = vmatpush2.msra.mxu0 0.0
        %1145 = vmatprep.subr.mxu0 0.0
        %1146 = vmatpush2.msra.mxu0 0.0
        %1147 = vmatprep.subr.mxu0 0.0
        %1148 = vmatpush2.msra.mxu0 0.0
        %1149 = vmatprep.mubr.f32.mxu0 0.0
        %1150 = vmatmul.mubr.f32.gmra.mxu0 %v728
        %v1151 = vpop.f32.mrf.mxu0
        %v1152 = vadd.f32 %v724, %v1151
        %v1153 = vpop.f32.mrf.mxu0
        %v1154 = vadd.f32 %v724, %v1153
        %1155 = vdwg.mxu0
        %1156 = vmatprep.subr.mxu0 0.0
        %1157 = vmatpush1.msra.mxu0 0.0
        %1158 = vmatprep.subr.mxu0 0.0
        %1159 = vmatpush1.msra.mxu0 0.0
        %1160 = vmatprep.subr.mxu0 0.0
        %1161 = vmatpush1.msra.mxu0 0.0
        %1162 = vmatprep.subr.mxu0 0.0
        %1163 = vmatpush1.msra.mxu0 0.0
        %1164 = vmatprep.subr.mxu0 0.0
        %1165 = vmatpush1.msra.mxu0 0.0
        %1166 = vmatprep.subr.mxu0 0.0
        %1167 = vmatpush1.msra.mxu0 0.0
        %1168 = vmatprep.subr.mxu0 0.0
        %1169 = vmatpush1.msra.mxu0 0.0
        %1170 = vmatprep.subr.mxu0 0.0
        %1171 = vmatpush1.msra.mxu0 0.0
        %1172 = vmatprep.subr.mxu0 %v711
        %1173 = vmatpush1.msra.mxu0 %v710
        %1174 = vmatprep.subr.mxu0 %v689
        %1175 = vmatpush1.msra.mxu0 %v688
        %1176 = vmatprep.subr.mxu0 %v667
        %1177 = vmatpush1.msra.mxu0 %v666
        %1178 = vmatprep.subr.mxu0 %v645
        %1179 = vmatpush1.msra.mxu0 %v644
        %1180 = vmatprep.subr.mxu0 %v623
        %1181 = vmatpush1.msra.mxu0 %v622
        %1182 = vmatprep.subr.mxu0 %v601
        %1183 = vmatpush1.msra.mxu0 %v600
        %1184 = vmatprep.subr.mxu0 %v579
        %1185 = vmatpush1.msra.mxu0 %v578
        %1186 = vmatprep.subr.mxu0 %v557
        %1187 = vmatpush1.msra.mxu0 %v556
        %1188 = vmatprep.subr.mxu0 0.0
        %1189 = vmatpush2.msra.mxu0 0.0
        %1190 = vmatprep.subr.mxu0 0.0
        %1191 = vmatpush2.msra.mxu0 0.0
        %1192 = vmatprep.subr.mxu0 0.0
        %1193 = vmatpush2.msra.mxu0 0.0
        %1194 = vmatprep.subr.mxu0 0.0
        %1195 = vmatpush2.msra.mxu0 0.0
        %1196 = vmatprep.subr.mxu0 0.0
        %1197 = vmatpush2.msra.mxu0 0.0
        %1198 = vmatprep.subr.mxu0 0.0
        %1199 = vmatpush2.msra.mxu0 0.0
        %1200 = vmatprep.subr.mxu0 0.0
        %1201 = vmatpush2.msra.mxu0 0.0
        %1202 = vmatprep.subr.mxu0 0.0
        %1203 = vmatpush2.msra.mxu0 0.0
        %1204 = vmatprep.subr.mxu0 0.0
        %1205 = vmatpush2.msra.mxu0 0.0
        %1206 = vmatprep.subr.mxu0 0.0
        %1207 = vmatpush2.msra.mxu0 0.0
        %1208 = vmatprep.subr.mxu0 0.0
        %1209 = vmatpush2.msra.mxu0 0.0
        %1210 = vmatprep.subr.mxu0 0.0
        %1211 = vmatpush2.msra.mxu0 0.0
        %1212 = vmatprep.subr.mxu0 0.0
        %1213 = vmatpush2.msra.mxu0 0.0
        %1214 = vmatprep.subr.mxu0 0.0
        %1215 = vmatpush2.msra.mxu0 0.0
        %1216 = vmatprep.subr.mxu0 0.0
        %1217 = vmatpush2.msra.mxu0 0.0
        %1218 = vmatprep.subr.mxu0 0.0
        %1219 = vmatpush2.msra.mxu0 0.0
        %1220 = vmatprep.mubr.f32.mxu0 0.0
        %1221 = vmatmul.mubr.f32.gmra.mxu0 %v728
        %v1222 = vpop.f32.mrf.mxu0
        %v1223 = vadd.f32 %v724, %v1222
        %v1224 = vpop.f32.mrf.mxu0
        %v1225 = vadd.f32 %v724, %v1224
        %1226 = vdwg.mxu0
        %1227 = vmatprep.subr.mxu0 0.0
        %1228 = vmatpush1.msra.mxu0 0.0
        %1229 = vmatprep.subr.mxu0 0.0
        %1230 = vmatpush1.msra.mxu0 0.0
        %1231 = vmatprep.subr.mxu0 0.0
        %1232 = vmatpush1.msra.mxu0 0.0
        %1233 = vmatprep.subr.mxu0 0.0
        %1234 = vmatpush1.msra.mxu0 0.0
        %1235 = vmatprep.subr.mxu0 0.0
        %1236 = vmatpush1.msra.mxu0 0.0
        %1237 = vmatprep.subr.mxu0 0.0
        %1238 = vmatpush1.msra.mxu0 0.0
        %1239 = vmatprep.subr.mxu0 0.0
        %1240 = vmatpush1.msra.mxu0 0.0
        %1241 = vmatprep.subr.mxu0 0.0
        %1242 = vmatpush1.msra.mxu0 0.0
        %1243 = vmatprep.subr.mxu0 %v713
        %1244 = vmatpush1.msra.mxu0 %v712
        %1245 = vmatprep.subr.mxu0 %v691
        %1246 = vmatpush1.msra.mxu0 %v690
        %1247 = vmatprep.subr.mxu0 %v669
        %1248 = vmatpush1.msra.mxu0 %v668
        %1249 = vmatprep.subr.mxu0 %v647
        %1250 = vmatpush1.msra.mxu0 %v646
        %1251 = vmatprep.subr.mxu0 %v625
        %1252 = vmatpush1.msra.mxu0 %v624
        %1253 = vmatprep.subr.mxu0 %v603
        %1254 = vmatpush1.msra.mxu0 %v602
        %1255 = vmatprep.subr.mxu0 %v581
        %1256 = vmatpush1.msra.mxu0 %v580
        %1257 = vmatprep.subr.mxu0 %v559
        %1258 = vmatpush1.msra.mxu0 %v558
        %1259 = vmatprep.subr.mxu0 0.0
        %1260 = vmatpush2.msra.mxu0 0.0
        %1261 = vmatprep.subr.mxu0 0.0
        %1262 = vmatpush2.msra.mxu0 0.0
        %1263 = vmatprep.subr.mxu0 0.0
        %1264 = vmatpush2.msra.mxu0 0.0
        %1265 = vmatprep.subr.mxu0 0.0
        %1266 = vmatpush2.msra.mxu0 0.0
        %1267 = vmatprep.subr.mxu0 0.0
        %1268 = vmatpush2.msra.mxu0 0.0
        %1269 = vmatprep.subr.mxu0 0.0
        %1270 = vmatpush2.msra.mxu0 0.0
        %1271 = vmatprep.subr.mxu0 0.0
        %1272 = vmatpush2.msra.mxu0 0.0
        %1273 = vmatprep.subr.mxu0 0.0
        %1274 = vmatpush2.msra.mxu0 0.0
        %1275 = vmatprep.subr.mxu0 0.0
        %1276 = vmatpush2.msra.mxu0 0.0
        %1277 = vmatprep.subr.mxu0 0.0
        %1278 = vmatpush2.msra.mxu0 0.0
        %1279 = vmatprep.subr.mxu0 0.0
        %1280 = vmatpush2.msra.mxu0 0.0
        %1281 = vmatprep.subr.mxu0 0.0
        %1282 = vmatpush2.msra.mxu0 0.0
        %1283 = vmatprep.subr.mxu0 0.0
        %1284 = vmatpush2.msra.mxu0 0.0
        %1285 = vmatprep.subr.mxu0 0.0
        %1286 = vmatpush2.msra.mxu0 0.0
        %1287 = vmatprep.subr.mxu0 0.0
        %1288 = vmatpush2.msra.mxu0 0.0
        %1289 = vmatprep.subr.mxu0 0.0
        %1290 = vmatpush2.msra.mxu0 0.0
        %1291 = vmatprep.mubr.f32.mxu0 0.0
        %1292 = vmatmul.mubr.f32.gmra.mxu0 %v728
        %v1293 = vpop.f32.mrf.mxu0
        %v1294 = vadd.f32 %v724, %v1293
        %v1295 = vpop.f32.mrf.mxu0
        %v1296 = vadd.f32 %v724, %v1295
        %1297 = vdwg.mxu0
        %1298 = vmatprep.subr.mxu0 0.0
        %1299 = vmatpush1.msra.mxu0 0.0
        %1300 = vmatprep.subr.mxu0 0.0
        %1301 = vmatpush1.msra.mxu0 0.0
        %1302 = vmatprep.subr.mxu0 0.0
        %1303 = vmatpush1.msra.mxu0 0.0
        %1304 = vmatprep.subr.mxu0 0.0
        %1305 = vmatpush1.msra.mxu0 0.0
        %1306 = vmatprep.subr.mxu0 0.0
        %1307 = vmatpush1.msra.mxu0 0.0
        %1308 = vmatprep.subr.mxu0 0.0
        %1309 = vmatpush1.msra.mxu0 0.0
        %1310 = vmatprep.subr.mxu0 0.0
        %1311 = vmatpush1.msra.mxu0 0.0
        %1312 = vmatprep.subr.mxu0 0.0
        %1313 = vmatpush1.msra.mxu0 0.0
        %1314 = vmatprep.subr.mxu0 %v715
        %1315 = vmatpush1.msra.mxu0 %v714
        %1316 = vmatprep.subr.mxu0 %v693
        %1317 = vmatpush1.msra.mxu0 %v692
        %1318 = vmatprep.subr.mxu0 %v671
        %1319 = vmatpush1.msra.mxu0 %v670
        %1320 = vmatprep.subr.mxu0 %v649
        %1321 = vmatpush1.msra.mxu0 %v648
        %1322 = vmatprep.subr.mxu0 %v627
        %1323 = vmatpush1.msra.mxu0 %v626
        %1324 = vmatprep.subr.mxu0 %v605
        %1325 = vmatpush1.msra.mxu0 %v604
        %1326 = vmatprep.subr.mxu0 %v583
        %1327 = vmatpush1.msra.mxu0 %v582
        %1328 = vmatprep.subr.mxu0 %v561
        %1329 = vmatpush1.msra.mxu0 %v560
        %1330 = vmatprep.subr.mxu0 0.0
        %1331 = vmatpush2.msra.mxu0 0.0
        %1332 = vmatprep.subr.mxu0 0.0
        %1333 = vmatpush2.msra.mxu0 0.0
        %1334 = vmatprep.subr.mxu0 0.0
        %1335 = vmatpush2.msra.mxu0 0.0
        %1336 = vmatprep.subr.mxu0 0.0
        %1337 = vmatpush2.msra.mxu0 0.0
        %1338 = vmatprep.subr.mxu0 0.0
        %1339 = vmatpush2.msra.mxu0 0.0
        %1340 = vmatprep.subr.mxu0 0.0
        %1341 = vmatpush2.msra.mxu0 0.0
        %1342 = vmatprep.subr.mxu0 0.0
        %1343 = vmatpush2.msra.mxu0 0.0
        %1344 = vmatprep.subr.mxu0 0.0
        %1345 = vmatpush2.msra.mxu0 0.0
        %1346 = vmatprep.subr.mxu0 0.0
        %1347 = vmatpush2.msra.mxu0 0.0
        %1348 = vmatprep.subr.mxu0 0.0
        %1349 = vmatpush2.msra.mxu0 0.0
        %1350 = vmatprep.subr.mxu0 0.0
        %1351 = vmatpush2.msra.mxu0 0.0
        %1352 = vmatprep.subr.mxu0 0.0
        %1353 = vmatpush2.msra.mxu0 0.0
        %1354 = vmatprep.subr.mxu0 0.0
        %1355 = vmatpush2.msra.mxu0 0.0
        %1356 = vmatprep.subr.mxu0 0.0
        %1357 = vmatpush2.msra.mxu0 0.0
        %1358 = vmatprep.subr.mxu0 0.0
        %1359 = vmatpush2.msra.mxu0 0.0
        %1360 = vmatprep.subr.mxu0 0.0
        %1361 = vmatpush2.msra.mxu0 0.0
        %1362 = vmatprep.mubr.f32.mxu0 0.0
        %1363 = vmatmul.mubr.f32.gmra.mxu0 %v728
        %v1364 = vpop.f32.mrf.mxu0
        %v1365 = vadd.f32 %v724, %v1364
        %v1366 = vpop.f32.mrf.mxu0
        %v1367 = vadd.f32 %v724, %v1366
        %1368 = vdwg.mxu0
        %1369 = vmatprep.subr.mxu0 0.0
        %1370 = vmatpush1.msra.mxu0 0.0
        %1371 = vmatprep.subr.mxu0 0.0
        %1372 = vmatpush1.msra.mxu0 0.0
        %1373 = vmatprep.subr.mxu0 0.0
        %1374 = vmatpush1.msra.mxu0 0.0
        %1375 = vmatprep.subr.mxu0 0.0
        %1376 = vmatpush1.msra.mxu0 0.0
        %1377 = vmatprep.subr.mxu0 0.0
        %1378 = vmatpush1.msra.mxu0 0.0
        %1379 = vmatprep.subr.mxu0 0.0
        %1380 = vmatpush1.msra.mxu0 0.0
        %1381 = vmatprep.subr.mxu0 0.0
        %1382 = vmatpush1.msra.mxu0 0.0
        %1383 = vmatprep.subr.mxu0 0.0
        %1384 = vmatpush1.msra.mxu0 0.0
        %1385 = vmatprep.subr.mxu0 %v717
        %1386 = vmatpush1.msra.mxu0 %v716
        %1387 = vmatprep.subr.mxu0 %v695
        %1388 = vmatpush1.msra.mxu0 %v694
        %1389 = vmatprep.subr.mxu0 %v673
        %1390 = vmatpush1.msra.mxu0 %v672
        %1391 = vmatprep.subr.mxu0 %v651
        %1392 = vmatpush1.msra.mxu0 %v650
        %1393 = vmatprep.subr.mxu0 %v629
        %1394 = vmatpush1.msra.mxu0 %v628
        %1395 = vmatprep.subr.mxu0 %v607
        %1396 = vmatpush1.msra.mxu0 %v606
        %1397 = vmatprep.subr.mxu0 %v585
        %1398 = vmatpush1.msra.mxu0 %v584
        %1399 = vmatprep.subr.mxu0 %v563
        %1400 = vmatpush1.msra.mxu0 %v562
        %1401 = vmatprep.subr.mxu0 0.0
        %1402 = vmatpush2.msra.mxu0 0.0
        %1403 = vmatprep.subr.mxu0 0.0
        %1404 = vmatpush2.msra.mxu0 0.0
        %1405 = vmatprep.subr.mxu0 0.0
        %1406 = vmatpush2.msra.mxu0 0.0
        %1407 = vmatprep.subr.mxu0 0.0
        %1408 = vmatpush2.msra.mxu0 0.0
        %1409 = vmatprep.subr.mxu0 0.0
        %1410 = vmatpush2.msra.mxu0 0.0
        %1411 = vmatprep.subr.mxu0 0.0
        %1412 = vmatpush2.msra.mxu0 0.0
        %1413 = vmatprep.subr.mxu0 0.0
        %1414 = vmatpush2.msra.mxu0 0.0
        %1415 = vmatprep.subr.mxu0 0.0
        %1416 = vmatpush2.msra.mxu0 0.0
        %1417 = vmatprep.subr.mxu0 0.0
        %1418 = vmatpush2.msra.mxu0 0.0
        %1419 = vmatprep.subr.mxu0 0.0
        %1420 = vmatpush2.msra.mxu0 0.0
        %1421 = vmatprep.subr.mxu0 0.0
        %1422 = vmatpush2.msra.mxu0 0.0
        %1423 = vmatprep.subr.mxu0 0.0
        %1424 = vmatpush2.msra.mxu0 0.0
        %1425 = vmatprep.subr.mxu0 0.0
        %1426 = vmatpush2.msra.mxu0 0.0
        %1427 = vmatprep.subr.mxu0 0.0
        %1428 = vmatpush2.msra.mxu0 0.0
        %1429 = vmatprep.subr.mxu0 0.0
        %1430 = vmatpush2.msra.mxu0 0.0
        %1431 = vmatprep.subr.mxu0 0.0
        %1432 = vmatpush2.msra.mxu0 0.0
        %1433 = vmatprep.mubr.f32.mxu0 0.0
        %1434 = vmatmul.mubr.f32.gmra.mxu0 %v728
        %v1435 = vpop.f32.mrf.mxu0
        %v1436 = vadd.f32 %v724, %v1435
        %v1437 = vpop.f32.mrf.mxu0
        %v1438 = vadd.f32 %v724, %v1437
        %1439 = vdwg.mxu0
        %1440 = vmatprep.subr.mxu0 0.0
        %1441 = vmatpush1.msra.mxu0 0.0
        %1442 = vmatprep.subr.mxu0 0.0
        %1443 = vmatpush1.msra.mxu0 0.0
        %1444 = vmatprep.subr.mxu0 0.0
        %1445 = vmatpush1.msra.mxu0 0.0
        %1446 = vmatprep.subr.mxu0 0.0
        %1447 = vmatpush1.msra.mxu0 0.0
        %1448 = vmatprep.subr.mxu0 0.0
        %1449 = vmatpush1.msra.mxu0 0.0
        %1450 = vmatprep.subr.mxu0 0.0
        %1451 = vmatpush1.msra.mxu0 0.0
        %1452 = vmatprep.subr.mxu0 0.0
        %1453 = vmatpush1.msra.mxu0 0.0
        %1454 = vmatprep.subr.mxu0 0.0
        %1455 = vmatpush1.msra.mxu0 0.0
        %1456 = vmatprep.subr.mxu0 %v719
        %1457 = vmatpush1.msra.mxu0 %v718
        %1458 = vmatprep.subr.mxu0 %v697
        %1459 = vmatpush1.msra.mxu0 %v696
        %1460 = vmatprep.subr.mxu0 %v675
        %1461 = vmatpush1.msra.mxu0 %v674
        %1462 = vmatprep.subr.mxu0 %v653
        %1463 = vmatpush1.msra.mxu0 %v652
        %1464 = vmatprep.subr.mxu0 %v631
        %1465 = vmatpush1.msra.mxu0 %v630
        %1466 = vmatprep.subr.mxu0 %v609
        %1467 = vmatpush1.msra.mxu0 %v608
        %1468 = vmatprep.subr.mxu0 %v587
        %1469 = vmatpush1.msra.mxu0 %v586
        %1470 = vmatprep.subr.mxu0 %v565
        %1471 = vmatpush1.msra.mxu0 %v564
        %1472 = vmatprep.subr.mxu0 0.0
        %1473 = vmatpush2.msra.mxu0 0.0
        %1474 = vmatprep.subr.mxu0 0.0
        %1475 = vmatpush2.msra.mxu0 0.0
        %1476 = vmatprep.subr.mxu0 0.0
        %1477 = vmatpush2.msra.mxu0 0.0
        %1478 = vmatprep.subr.mxu0 0.0
        %1479 = vmatpush2.msra.mxu0 0.0
        %1480 = vmatprep.subr.mxu0 0.0
        %1481 = vmatpush2.msra.mxu0 0.0
        %1482 = vmatprep.subr.mxu0 0.0
        %1483 = vmatpush2.msra.mxu0 0.0
        %1484 = vmatprep.subr.mxu0 0.0
        %1485 = vmatpush2.msra.mxu0 0.0
        %1486 = vmatprep.subr.mxu0 0.0
        %1487 = vmatpush2.msra.mxu0 0.0
        %1488 = vmatprep.subr.mxu0 0.0
        %1489 = vmatpush2.msra.mxu0 0.0
        %1490 = vmatprep.subr.mxu0 0.0
        %1491 = vmatpush2.msra.mxu0 0.0
        %1492 = vmatprep.subr.mxu0 0.0
        %1493 = vmatpush2.msra.mxu0 0.0
        %1494 = vmatprep.subr.mxu0 0.0
        %1495 = vmatpush2.msra.mxu0 0.0
        %1496 = vmatprep.subr.mxu0 0.0
        %1497 = vmatpush2.msra.mxu0 0.0
        %1498 = vmatprep.subr.mxu0 0.0
        %1499 = vmatpush2.msra.mxu0 0.0
        %1500 = vmatprep.subr.mxu0 0.0
        %1501 = vmatpush2.msra.mxu0 0.0
        %1502 = vmatprep.subr.mxu0 0.0
        %1503 = vmatpush2.msra.mxu0 0.0
        %1504 = vmatprep.mubr.f32.mxu0 0.0
        %1505 = vmatmul.mubr.f32.gmra.mxu0 %v728
        %v1506 = vpop.f32.mrf.mxu0
        %v1507 = vadd.f32 %v724, %v1506
        %v1508 = vpop.f32.mrf.mxu0
        %v1509 = vadd.f32 %v724, %v1508
        %1510 = vdwg.mxu0
        %1511 = vst [vmem:[%s541] sm:$0xff] %v797
        %1512 = vst [vmem:[%s541 + $0x8] sm:$0xff] %v799
        %1513 = vst [vmem:[%s541 + $0x10] sm:$0xff] %v868
        %1514 = vst [vmem:[%s541 + $0x18] sm:$0xff] %v870
        %1515 = vst [vmem:[%s541 + $0x20] sm:$0xff] %v939
        %1516 = vst [vmem:[%s541 + $0x28] sm:$0xff] %v941
        %1517 = vst [vmem:[%s541 + $0x30] sm:$0xff] %v1010
        %1518 = vst [vmem:[%s541 + $0x38] sm:$0xff] %v1012
        %1519 = vst [vmem:[%s541 + $0x40] sm:$0xff] %v1081
        %1520 = vst [vmem:[%s541 + $0x48] sm:$0xff] %v1083
        %1521 = vst [vmem:[%s541 + $0x50] sm:$0xff] %v1152
        %1522 = vst [vmem:[%s541 + $0x58] sm:$0xff] %v1154
        %1523 = vst [vmem:[%s541 + $0x60] sm:$0xff] %v1223
        %1524 = vst [vmem:[%s541 + $0x68] sm:$0xff] %v1225
        %1525 = vst [vmem:[%s541 + $0x70] sm:$0xff] %v1294
        %1526 = vst [vmem:[%s541 + $0x78] sm:$0xff] %v1296
        %1527 = vst [vmem:[%s541 + $0x80] sm:$0xff] %v1365
        %1528 = vst [vmem:[%s541 + $0x88] sm:$0xff] %v1367
        %1529 = vst [vmem:[%s541 + $0x90] sm:$0xff] %v1436
        %1530 = vst [vmem:[%s541 + $0x98] sm:$0xff] %v1438
        %1531 = vst [vmem:[%s541 + $0xa0] sm:$0xff] %v1507
        %1532 = vst [vmem:[%s541 + $0xa8] sm:$0xff] %v1509
        %s1533 = smul.u32 22, %s14
        %p1534 = scmp.lt.s32.totalorder %s1533, 87
        %s1535 = scalar_select %p1534, %s1533, 87
        %s1536 = smul.addr %s1535, 8
        %s1537 = scalar_lea.vmem %s3, %s1536
        // Predicated region
        $region56: #{actor_forward.4} parent=50 // pred_check
          %p1538 = pneg %p100
        $region57: #{actor_forward.4} parent=50 // pred_check_branch
          %1540 = sbr.rel (%p1538) target = $region59
        $region58: #{actor_forward.4} parent=50 // pred_region
          %s1541 = smul.u32 22, %s14
        $region59: #{actor_forward.4} parent=50 // pred_fallthru
          _
      $region51: #{actor_forward.4} parent=5 // pred_fallthru
        _
      %p1542 = scmp.le.s32.totalorder 2, %s9
      // Predicated region
      $region60: #{actor_forward.4} parent=5 // pred_check
        %p1543 = pneg %p1542
      $region61: #{actor_forward.4} parent=5 // pred_check_branch
        %1545 = sbr.rel (%p1543) target = $region63
      $region62: #{actor_forward.4} parent=5 // pred_region
        %s1546 = ssub.s32 %s9, 2
        // Predicated region
        $region64: #{actor_forward.4} parent=62 // pred_check
          %p1547 = pneg %p106
        $region65: #{actor_forward.4} parent=62 // pred_check_branch
          %1549 = sbr.rel (%p1547) target = $region67
        $region66: #{actor_forward.4} parent=62 // pred_region
          %s1550 = smul.u32 22, %s15
          %p1551 = scmp.lt.s32.totalorder %s1550, 87
          %s1552 = scalar_select %p1551, %s1550, 87
          %s1553 = smul.addr %s1552, 8
          %s1554 = scalar_lea.vmem %s3, %s1553
        $region67: #{actor_forward.4} parent=62 // pred_fallthru
          _
      $region63: #{actor_forward.4} parent=5 // pred_fallthru
        _
    $region6: #{actor_forward.4} parent=1 // loop_footer
      %s13 = sadd.s32 1, %s9
    $region7: #{actor_forward.4} parent=1 // loop_footer_branch
      %8 = sbr.rel target = $region3
    $region8: #{actor_forward.4} parent=1 // loop_exit
      _

// kernel: actor_forward.5
$region0: #{actor_forward.5}
  #allocation0 [shape = 'u32[]', space=smem, size = 0x4, offset = 0x4, fixed_abs, tag = 'smem constant byte address 0x4 - core index']
  #allocation1 [shape = 'u32[144,128]{1,0:T(1,128)}', space=vmem, size = 0x12000, scoped, tag = 'internal scratch']
  %s0 = inlined_call_operand.vmem [shape: f32[16,128], index: 0, kind: input, shape index: {}]
  %s1 = inlined_call_operand.vmem [shape: f32[128,768], index: 1, kind: input, shape index: {}]
  %s2 = inlined_call_operand.vmem [shape: f32[16,1], index: 2, kind: input, shape index: {}]
  %s3 = inlined_call_operand.vmem [shape: f32[16,768], index: 3, kind: output, shape index: {}]
  %s4 = sld [smem:[#allocation0]]
  $region22: #{actor_forward.5} parent=0
    _
  %s6 = ssub.s32 1, %s4
  %s7 = scalar_select 0, %s6, %s4
  // Predicated region
  $region2: #{actor_forward.5} parent=0 // pred_check
    _
  $region3: #{actor_forward.5} parent=0 // pred_check_branch
    %9 = sbr.rel (0) target = $region5
  $region4: #{actor_forward.5} parent=0 // pred_region
    _
  $region5: #{actor_forward.5} parent=0 // pred_fallthru
    _
  // Predicated region
  $region6: #{actor_forward.5} parent=0 // pred_check
    _
  $region7: #{actor_forward.5} parent=0 // pred_check_branch
    %11 = sbr.rel (0) target = $region9
  $region8: #{actor_forward.5} parent=0 // pred_region
    _
  $region9: #{actor_forward.5} parent=0 // pred_fallthru
    _
  // Predicated region
  $region10: #{actor_forward.5} parent=0 // pred_check
    _
  $region11: #{actor_forward.5} parent=0 // pred_check_branch
    %13 = sbr.rel (0) target = $region13
  $region12: #{actor_forward.5} parent=0 // pred_region
    _
  $region13: #{actor_forward.5} parent=0 // pred_fallthru
    _
  %v14 = vld [vmem:[%s0] sm:$0xff]
  %v15 = vld [vmem:[%s0 + $0x8] sm:$0xff]
  %v16 = vld [vmem:[%s1] sm:$0xff]
  %v17 = vld [vmem:[%s1 + $0x8] sm:$0xff]
  %v18 = vld [vmem:[%s1 + $0x10] sm:$0xff]
  %v19 = vld [vmem:[%s1 + $0x18] sm:$0xff]
  %v20 = vld [vmem:[%s1 + $0x20] sm:$0xff]
  %v21 = vld [vmem:[%s1 + $0x28] sm:$0xff]
  %v22 = vld [vmem:[%s1 + $0x30] sm:$0xff]
  %v23 = vld [vmem:[%s1 + $0x38] sm:$0xff]
  %v24 = vld [vmem:[%s1 + $0x40] sm:$0xff]
  %v25 = vld [vmem:[%s1 + $0x48] sm:$0xff]
  %v26 = vld [vmem:[%s1 + $0x50] sm:$0xff]
  %v27 = vld [vmem:[%s1 + $0x58] sm:$0xff]
  %v28 = vld [vmem:[%s1 + $0x60] sm:$0xff]
  %v29 = vld [vmem:[%s1 + $0x68] sm:$0xff]
  %v30 = vld [vmem:[%s1 + $0x70] sm:$0xff]
  %v31 = vld [vmem:[%s1 + $0x78] sm:$0xff]
  %v32 = vld [vmem:[%s1 + $0x80] sm:$0xff]
  %v33 = vld [vmem:[%s1 + $0x88] sm:$0xff]
  %v34 = vld [vmem:[%s1 + $0x90] sm:$0xff]
  %v35 = vld [vmem:[%s1 + $0x98] sm:$0xff]
  %v36 = vld [vmem:[%s1 + $0xa0] sm:$0xff]
  %v37 = vld [vmem:[%s1 + $0xa8] sm:$0xff]
  %v38 = vld [vmem:[%s1 + $0xb0] sm:$0xff]
  %v39 = vld [vmem:[%s1 + $0xb8] sm:$0xff]
  %v40 = vld [vmem:[%s1 + $0xc0] sm:$0xff]
  %v41 = vld [vmem:[%s1 + $0xc8] sm:$0xff]
  %v42 = vld [vmem:[%s1 + $0xd0] sm:$0xff]
  %v43 = vld [vmem:[%s1 + $0xd8] sm:$0xff]
  %v44 = vld [vmem:[%s1 + $0xe0] sm:$0xff]
  %v45 = vld [vmem:[%s1 + $0xe8] sm:$0xff]
  %v46 = vld [vmem:[%s1 + $0xf0] sm:$0xff]
  %v47 = vld [vmem:[%s1 + $0xf8] sm:$0xff]
  %v48 = vld [vmem:[%s1 + $0x100] sm:$0xff]
  %v49 = vld [vmem:[%s1 + $0x108] sm:$0xff]
  %v50 = vld [vmem:[%s1 + $0x110] sm:$0xff]
  %v51 = vld [vmem:[%s1 + $0x118] sm:$0xff]
  %v52 = vld [vmem:[%s1 + $0x120] sm:$0xff]
  %v53 = vld [vmem:[%s1 + $0x128] sm:$0xff]
  %v54 = vld [vmem:[%s1 + $0x130] sm:$0xff]
  %v55 = vld [vmem:[%s1 + $0x138] sm:$0xff]
  %v56 = vld [vmem:[%s1 + $0x140] sm:$0xff]
  %v57 = vld [vmem:[%s1 + $0x148] sm:$0xff]
  %v58 = vld [vmem:[%s1 + $0x150] sm:$0xff]
  %v59 = vld [vmem:[%s1 + $0x158] sm:$0xff]
  %v60 = vld [vmem:[%s1 + $0x160] sm:$0xff]
  %v61 = vld [vmem:[%s1 + $0x168] sm:$0xff]
  %v62 = vld [vmem:[%s1 + $0x170] sm:$0xff]
  %v63 = vld [vmem:[%s1 + $0x178] sm:$0xff]
  %v64 = vld [vmem:[%s1 + $0x180] sm:$0xff]
  %v65 = vld [vmem:[%s1 + $0x188] sm:$0xff]
  %v66 = vld [vmem:[%s1 + $0x190] sm:$0xff]
  %v67 = vld [vmem:[%s1 + $0x198] sm:$0xff]
  %v68 = vld [vmem:[%s1 + $0x1a0] sm:$0xff]
  %v69 = vld [vmem:[%s1 + $0x1a8] sm:$0xff]
  %v70 = vld [vmem:[%s1 + $0x1b0] sm:$0xff]
  %v71 = vld [vmem:[%s1 + $0x1b8] sm:$0xff]
  %v72 = vld [vmem:[%s1 + $0x1c0] sm:$0xff]
  %v73 = vld [vmem:[%s1 + $0x1c8] sm:$0xff]
  %v74 = vld [vmem:[%s1 + $0x1d0] sm:$0xff]
  %v75 = vld [vmem:[%s1 + $0x1d8] sm:$0xff]
  %v76 = vld [vmem:[%s1 + $0x1e0] sm:$0xff]
  %v77 = vld [vmem:[%s1 + $0x1e8] sm:$0xff]
  %v78 = vld [vmem:[%s1 + $0x1f0] sm:$0xff]
  %v79 = vld [vmem:[%s1 + $0x1f8] sm:$0xff]
  %v80 = vld [vmem:[%s1 + $0x200] sm:$0xff]
  %v81 = vld [vmem:[%s1 + $0x208] sm:$0xff]
  %v82 = vld [vmem:[%s1 + $0x210] sm:$0xff]
  %v83 = vld [vmem:[%s1 + $0x218] sm:$0xff]
  %v84 = vld [vmem:[%s1 + $0x220] sm:$0xff]
  %v85 = vld [vmem:[%s1 + $0x228] sm:$0xff]
  %v86 = vld [vmem:[%s1 + $0x230] sm:$0xff]
  %v87 = vld [vmem:[%s1 + $0x238] sm:$0xff]
  %v88 = vld [vmem:[%s1 + $0x240] sm:$0xff]
  %v89 = vld [vmem:[%s1 + $0x248] sm:$0xff]
  %v90 = vld [vmem:[%s1 + $0x250] sm:$0xff]
  %v91 = vld [vmem:[%s1 + $0x258] sm:$0xff]
  %v92 = vld [vmem:[%s1 + $0x260] sm:$0xff]
  %v93 = vld [vmem:[%s1 + $0x268] sm:$0xff]
  %v94 = vld [vmem:[%s1 + $0x270] sm:$0xff]
  %v95 = vld [vmem:[%s1 + $0x278] sm:$0xff]
  %v96 = vld [vmem:[%s1 + $0x280] sm:$0xff]
  %v97 = vld [vmem:[%s1 + $0x288] sm:$0xff]
  %v98 = vld [vmem:[%s1 + $0x290] sm:$0xff]
  %v99 = vld [vmem:[%s1 + $0x298] sm:$0xff]
  %v100 = vld [vmem:[%s1 + $0x2a0] sm:$0xff]
  %v101 = vld [vmem:[%s1 + $0x2a8] sm:$0xff]
  %v102 = vld [vmem:[%s1 + $0x2b0] sm:$0xff]
  %v103 = vld [vmem:[%s1 + $0x2b8] sm:$0xff]
  %v104 = vld [vmem:[%s1 + $0x2c0] sm:$0xff]
  %v105 = vld [vmem:[%s1 + $0x2c8] sm:$0xff]
  %v106 = vld [vmem:[%s1 + $0x2d0] sm:$0xff]
  %v107 = vld [vmem:[%s1 + $0x2d8] sm:$0xff]
  %v108 = vld [vmem:[%s1 + $0x2e0] sm:$0xff]
  %v109 = vld [vmem:[%s1 + $0x2e8] sm:$0xff]
  %v110 = vld [vmem:[%s1 + $0x2f0] sm:$0xff]
  %v111 = vld [vmem:[%s1 + $0x2f8] sm:$0xff]
  %v112 = vld [vmem:[%s2] sm:$0xff]
  %v113 = vld [vmem:[%s2 + $0x8] sm:$0xff]
  %115 = vset.pattern.permute.xlu0 0
  %116 = vperm.xlu0 %115, %v112
  %v117 = vpop.permute.xlu0 %116
  %120 = vset.pattern.permute.xlu0 0
  %121 = vperm.xlu0 %120, %v113
  %v122 = vpop.permute.xlu0 %121
  %124 = vmatprep.subr.mxu0 %v107
  %125 = vmatpush1.msra.mxu0 %v106
  %126 = vmatprep.subr.mxu0 %v101
  %127 = vmatpush1.msra.mxu0 %v100
  %128 = vmatprep.subr.mxu0 %v95
  %129 = vmatpush1.msra.mxu0 %v94
  %130 = vmatprep.subr.mxu0 %v89
  %131 = vmatpush1.msra.mxu0 %v88
  %132 = vmatprep.subr.mxu0 %v83
  %133 = vmatpush1.msra.mxu0 %v82
  %134 = vmatprep.subr.mxu0 %v77
  %135 = vmatpush1.msra.mxu0 %v76
  %136 = vmatprep.subr.mxu0 %v71
  %137 = vmatpush1.msra.mxu0 %v70
  %138 = vmatprep.subr.mxu0 %v65
  %139 = vmatpush1.msra.mxu0 %v64
  %140 = vmatprep.subr.mxu0 %v59
  %141 = vmatpush1.msra.mxu0 %v58
  %142 = vmatprep.subr.mxu0 %v53
  %143 = vmatpush1.msra.mxu0 %v52
  %144 = vmatprep.subr.mxu0 %v47
  %145 = vmatpush1.msra.mxu0 %v46
  %146 = vmatprep.subr.mxu0 %v41
  %147 = vmatpush1.msra.mxu0 %v40
  %148 = vmatprep.subr.mxu0 %v35
  %149 = vmatpush1.msra.mxu0 %v34
  %150 = vmatprep.subr.mxu0 %v29
  %151 = vmatpush1.msra.mxu0 %v28
  %152 = vmatprep.subr.mxu0 %v23
  %153 = vmatpush1.msra.mxu0 %v22
  %154 = vmatprep.subr.mxu0 %v17
  %155 = vmatpush1.msra.mxu0 %v16
  %156 = vmatprep.subr.mxu0 0.0
  %157 = vmatpush2.msra.mxu0 0.0
  %158 = vmatprep.subr.mxu0 0.0
  %159 = vmatpush2.msra.mxu0 0.0
  %160 = vmatprep.subr.mxu0 0.0
  %161 = vmatpush2.msra.mxu0 0.0
  %162 = vmatprep.subr.mxu0 0.0
  %163 = vmatpush2.msra.mxu0 0.0
  %164 = vmatprep.subr.mxu0 0.0
  %165 = vmatpush2.msra.mxu0 0.0
  %166 = vmatprep.subr.mxu0 0.0
  %167 = vmatpush2.msra.mxu0 0.0
  %168 = vmatprep.subr.mxu0 0.0
  %169 = vmatpush2.msra.mxu0 0.0
  %170 = vmatprep.subr.mxu0 0.0
  %171 = vmatpush2.msra.mxu0 0.0
  %172 = vmatprep.subr.mxu0 0.0
  %173 = vmatpush2.msra.mxu0 0.0
  %174 = vmatprep.subr.mxu0 0.0
  %175 = vmatpush2.msra.mxu0 0.0
  %176 = vmatprep.subr.mxu0 0.0
  %177 = vmatpush2.msra.mxu0 0.0
  %178 = vmatprep.subr.mxu0 0.0
  %179 = vmatpush2.msra.mxu0 0.0
  %180 = vmatprep.subr.mxu0 0.0
  %181 = vmatpush2.msra.mxu0 0.0
  %182 = vmatprep.subr.mxu0 0.0
  %183 = vmatpush2.msra.mxu0 0.0
  %184 = vmatprep.subr.mxu0 0.0
  %185 = vmatpush2.msra.mxu0 0.0
  %186 = vmatprep.subr.mxu0 0.0
  %187 = vmatpush2.msra.mxu0 0.0
  %188 = vmatprep.mubr.f32.mxu0 0.0
  %189 = vmatmul.mubr.f32.gmra.mxu0 %v14
  %v190 = vpop.f32.mrf.mxu0
  %v191 = vadd.f32 %v117, %v190
  %v192 = vpop.f32.mrf.mxu0
  %v193 = vadd.f32 %v117, %v192
  %194 = vmatprep.mubr.f32.mxu0 0.0
  %195 = vmatmul.mubr.f32.gmra.mxu0 %v15
  %v196 = vpop.f32.mrf.mxu0
  %v197 = vadd.f32 %v122, %v196
  %v198 = vpop.f32.mrf.mxu0
  %v199 = vadd.f32 %v122, %v198
  %200 = vdwg.mxu0
  %201 = vmatprep.subr.mxu0 %v109
  %202 = vmatpush1.msra.mxu0 %v108
  %203 = vmatprep.subr.mxu0 %v103
  %204 = vmatpush1.msra.mxu0 %v102
  %205 = vmatprep.subr.mxu0 %v97
  %206 = vmatpush1.msra.mxu0 %v96
  %207 = vmatprep.subr.mxu0 %v91
  %208 = vmatpush1.msra.mxu0 %v90
  %209 = vmatprep.subr.mxu0 %v85
  %210 = vmatpush1.msra.mxu0 %v84
  %211 = vmatprep.subr.mxu0 %v79
  %212 = vmatpush1.msra.mxu0 %v78
  %213 = vmatprep.subr.mxu0 %v73
  %214 = vmatpush1.msra.mxu0 %v72
  %215 = vmatprep.subr.mxu0 %v67
  %216 = vmatpush1.msra.mxu0 %v66
  %217 = vmatprep.subr.mxu0 %v61
  %218 = vmatpush1.msra.mxu0 %v60
  %219 = vmatprep.subr.mxu0 %v55
  %220 = vmatpush1.msra.mxu0 %v54
  %221 = vmatprep.subr.mxu0 %v49
  %222 = vmatpush1.msra.mxu0 %v48
  %223 = vmatprep.subr.mxu0 %v43
  %224 = vmatpush1.msra.mxu0 %v42
  %225 = vmatprep.subr.mxu0 %v37
  %226 = vmatpush1.msra.mxu0 %v36
  %227 = vmatprep.subr.mxu0 %v31
  %228 = vmatpush1.msra.mxu0 %v30
  %229 = vmatprep.subr.mxu0 %v25
  %230 = vmatpush1.msra.mxu0 %v24
  %231 = vmatprep.subr.mxu0 %v19
  %232 = vmatpush1.msra.mxu0 %v18
  %233 = vmatprep.subr.mxu0 0.0
  %234 = vmatpush2.msra.mxu0 0.0
  %235 = vmatprep.subr.mxu0 0.0
  %236 = vmatpush2.msra.mxu0 0.0
  %237 = vmatprep.subr.mxu0 0.0
  %238 = vmatpush2.msra.mxu0 0.0
  %239 = vmatprep.subr.mxu0 0.0
  %240 = vmatpush2.msra.mxu0 0.0
  %241 = vmatprep.subr.mxu0 0.0
  %242 = vmatpush2.msra.mxu0 0.0
  %243 = vmatprep.subr.mxu0 0.0
  %244 = vmatpush2.msra.mxu0 0.0
  %245 = vmatprep.subr.mxu0 0.0
  %246 = vmatpush2.msra.mxu0 0.0
  %247 = vmatprep.subr.mxu0 0.0
  %248 = vmatpush2.msra.mxu0 0.0
  %249 = vmatprep.subr.mxu0 0.0
  %250 = vmatpush2.msra.mxu0 0.0
  %251 = vmatprep.subr.mxu0 0.0
  %252 = vmatpush2.msra.mxu0 0.0
  %253 = vmatprep.subr.mxu0 0.0
  %254 = vmatpush2.msra.mxu0 0.0
  %255 = vmatprep.subr.mxu0 0.0
  %256 = vmatpush2.msra.mxu0 0.0
  %257 = vmatprep.subr.mxu0 0.0
  %258 = vmatpush2.msra.mxu0 0.0
  %259 = vmatprep.subr.mxu0 0.0
  %260 = vmatpush2.msra.mxu0 0.0
  %261 = vmatprep.subr.mxu0 0.0
  %262 = vmatpush2.msra.mxu0 0.0
  %263 = vmatprep.subr.mxu0 0.0
  %264 = vmatpush2.msra.mxu0 0.0
  %265 = vmatprep.mubr.f32.mxu0 0.0
  %266 = vmatmul.mubr.f32.gmra.mxu0 %v14
  %v267 = vpop.f32.mrf.mxu0
  %v268 = vadd.f32 %v117, %v267
  %v269 = vpop.f32.mrf.mxu0
  %v270 = vadd.f32 %v117, %v269
  %271 = vmatprep.mubr.f32.mxu0 0.0
  %272 = vmatmul.mubr.f32.gmra.mxu0 %v15
  %v273 = vpop.f32.mrf.mxu0
  %v274 = vadd.f32 %v122, %v273
  %v275 = vpop.f32.mrf.mxu0
  %v276 = vadd.f32 %v122, %v275
  %277 = vdwg.mxu0
  %278 = vmatprep.subr.mxu0 %v111
  %279 = vmatpush1.msra.mxu0 %v110
  %280 = vmatprep.subr.mxu0 %v105
  %281 = vmatpush1.msra.mxu0 %v104
  %282 = vmatprep.subr.mxu0 %v99
  %283 = vmatpush1.msra.mxu0 %v98
  %284 = vmatprep.subr.mxu0 %v93
  %285 = vmatpush1.msra.mxu0 %v92
  %286 = vmatprep.subr.mxu0 %v87
  %287 = vmatpush1.msra.mxu0 %v86
  %288 = vmatprep.subr.mxu0 %v81
  %289 = vmatpush1.msra.mxu0 %v80
  %290 = vmatprep.subr.mxu0 %v75
  %291 = vmatpush1.msra.mxu0 %v74
  %292 = vmatprep.subr.mxu0 %v69
  %293 = vmatpush1.msra.mxu0 %v68
  %294 = vmatprep.subr.mxu0 %v63
  %295 = vmatpush1.msra.mxu0 %v62
  %296 = vmatprep.subr.mxu0 %v57
  %297 = vmatpush1.msra.mxu0 %v56
  %298 = vmatprep.subr.mxu0 %v51
  %299 = vmatpush1.msra.mxu0 %v50
  %300 = vmatprep.subr.mxu0 %v45
  %301 = vmatpush1.msra.mxu0 %v44
  %302 = vmatprep.subr.mxu0 %v39
  %303 = vmatpush1.msra.mxu0 %v38
  %304 = vmatprep.subr.mxu0 %v33
  %305 = vmatpush1.msra.mxu0 %v32
  %306 = vmatprep.subr.mxu0 %v27
  %307 = vmatpush1.msra.mxu0 %v26
  %308 = vmatprep.subr.mxu0 %v21
  %309 = vmatpush1.msra.mxu0 %v20
  %310 = vmatprep.subr.mxu0 0.0
  %311 = vmatpush2.msra.mxu0 0.0
  %312 = vmatprep.subr.mxu0 0.0
  %313 = vmatpush2.msra.mxu0 0.0
  %314 = vmatprep.subr.mxu0 0.0
  %315 = vmatpush2.msra.mxu0 0.0
  %316 = vmatprep.subr.mxu0 0.0
  %317 = vmatpush2.msra.mxu0 0.0
  %318 = vmatprep.subr.mxu0 0.0
  %319 = vmatpush2.msra.mxu0 0.0
  %320 = vmatprep.subr.mxu0 0.0
  %321 = vmatpush2.msra.mxu0 0.0
  %322 = vmatprep.subr.mxu0 0.0
  %323 = vmatpush2.msra.mxu0 0.0
  %324 = vmatprep.subr.mxu0 0.0
  %325 = vmatpush2.msra.mxu0 0.0
  %326 = vmatprep.subr.mxu0 0.0
  %327 = vmatpush2.msra.mxu0 0.0
  %328 = vmatprep.subr.mxu0 0.0
  %329 = vmatpush2.msra.mxu0 0.0
  %330 = vmatprep.subr.mxu0 0.0
  %331 = vmatpush2.msra.mxu0 0.0
  %332 = vmatprep.subr.mxu0 0.0
  %333 = vmatpush2.msra.mxu0 0.0
  %334 = vmatprep.subr.mxu0 0.0
  %335 = vmatpush2.msra.mxu0 0.0
  %336 = vmatprep.subr.mxu0 0.0
  %337 = vmatpush2.msra.mxu0 0.0
  %338 = vmatprep.subr.mxu0 0.0
  %339 = vmatpush2.msra.mxu0 0.0
  %340 = vmatprep.subr.mxu0 0.0
  %341 = vmatpush2.msra.mxu0 0.0
  %342 = vmatprep.mubr.f32.mxu0 0.0
  %343 = vmatmul.mubr.f32.gmra.mxu0 %v14
  %v344 = vpop.f32.mrf.mxu0
  %v345 = vadd.f32 %v117, %v344
  %v346 = vpop.f32.mrf.mxu0
  %v347 = vadd.f32 %v117, %v346
  %348 = vmatprep.mubr.f32.mxu0 0.0
  %349 = vmatmul.mubr.f32.gmra.mxu0 %v15
  %v350 = vpop.f32.mrf.mxu0
  %v351 = vadd.f32 %v122, %v350
  %v352 = vpop.f32.mrf.mxu0
  %v353 = vadd.f32 %v122, %v352
  %354 = vdwg.mxu0
  %355 = vst [vmem:[%s3] sm:$0xff] %v191
  %356 = vst [vmem:[%s3 + $0x8] sm:$0xff] %v193
  %357 = vst [vmem:[%s3 + $0x10] sm:$0xff] %v268
  %358 = vst [vmem:[%s3 + $0x18] sm:$0xff] %v270
  %359 = vst [vmem:[%s3 + $0x20] sm:$0xff] %v345
  %360 = vst [vmem:[%s3 + $0x28] sm:$0xff] %v347
  %361 = vst [vmem:[%s3 + $0x30] sm:$0xff] %v197
  %362 = vst [vmem:[%s3 + $0x38] sm:$0xff] %v199
  %363 = vst [vmem:[%s3 + $0x40] sm:$0xff] %v274
  %364 = vst [vmem:[%s3 + $0x48] sm:$0xff] %v276
  %365 = vst [vmem:[%s3 + $0x50] sm:$0xff] %v351
  %366 = vst [vmem:[%s3 + $0x58] sm:$0xff] %v353
  // Predicated region
  $region14: #{actor_forward.5} parent=0 // pred_check
    _
  $region15: #{actor_forward.5} parent=0 // pred_check_branch
    %368 = sbr.rel (0) target = $region17
  $region16: #{actor_forward.5} parent=0 // pred_region
    _
  $region17: #{actor_forward.5} parent=0 // pred_fallthru
    _
  // Predicated region
  $region18: #{actor_forward.5} parent=0 // pred_check
    _
  $region19: #{actor_forward.5} parent=0 // pred_check_branch
    %370 = sbr.rel (0) target = $region21
  $region20: #{actor_forward.5} parent=0 // pred_region
    _
  $region21: #{actor_forward.5} parent=0 // pred_fallthru
    _

// kernel: actor_forward.6
$region0: #{actor_forward.6}
  #allocation0 [shape = 'u32[]', space=smem, size = 0x4, offset = 0x4, fixed_abs, tag = 'smem constant byte address 0x4 - core index']
  #allocation1 [shape = 'u32[144,128]{1,0:T(1,128)}', space=vmem, size = 0x12000, scoped, tag = 'internal scratch']
  %s0 = inlined_call_operand.vmem [shape: f32[32,256], index: 0, kind: input, shape index: {}]
  %s1 = inlined_call_operand.vmem [shape: f32[256,128], index: 1, kind: input, shape index: {}]
  %s2 = inlined_call_operand.vmem [shape: f32[32,1], index: 2, kind: input, shape index: {}]
  %s3 = inlined_call_operand.vmem [shape: f32[32,128], index: 3, kind: output, shape index: {}]
  %s4 = sld [smem:[#allocation0]]
  $region22: #{actor_forward.6} parent=0
    _
  %s6 = ssub.s32 1, %s4
  %s7 = scalar_select 0, %s6, %s4
  // Predicated region
  $region2: #{actor_forward.6} parent=0 // pred_check
    _
  $region3: #{actor_forward.6} parent=0 // pred_check_branch
    %9 = sbr.rel (0) target = $region5
  $region4: #{actor_forward.6} parent=0 // pred_region
    _
  $region5: #{actor_forward.6} parent=0 // pred_fallthru
    _
  // Predicated region
  $region6: #{actor_forward.6} parent=0 // pred_check
    _
  $region7: #{actor_forward.6} parent=0 // pred_check_branch
    %11 = sbr.rel (0) target = $region9
  $region8: #{actor_forward.6} parent=0 // pred_region
    _
  $region9: #{actor_forward.6} parent=0 // pred_fallthru
    _
  // Predicated region
  $region10: #{actor_forward.6} parent=0 // pred_check
    _
  $region11: #{actor_forward.6} parent=0 // pred_check_branch
    %13 = sbr.rel (0) target = $region13
  $region12: #{actor_forward.6} parent=0 // pred_region
    _
  $region13: #{actor_forward.6} parent=0 // pred_fallthru
    _
  %v14 = vld [vmem:[%s0] sm:$0xff]
  %v15 = vld [vmem:[%s0 + $0x8] sm:$0xff]
  %v16 = vld [vmem:[%s0 + $0x10] sm:$0xff]
  %v17 = vld [vmem:[%s0 + $0x18] sm:$0xff]
  %v18 = vld [vmem:[%s0 + $0x20] sm:$0xff]
  %v19 = vld [vmem:[%s0 + $0x28] sm:$0xff]
  %v20 = vld [vmem:[%s0 + $0x30] sm:$0xff]
  %v21 = vld [vmem:[%s0 + $0x38] sm:$0xff]
  %v22 = vld [vmem:[%s1] sm:$0xff]
  %v23 = vld [vmem:[%s1 + $0x8] sm:$0xff]
  %v24 = vld [vmem:[%s1 + $0x10] sm:$0xff]
  %v25 = vld [vmem:[%s1 + $0x18] sm:$0xff]
  %v26 = vld [vmem:[%s1 + $0x20] sm:$0xff]
  %v27 = vld [vmem:[%s1 + $0x28] sm:$0xff]
  %v28 = vld [vmem:[%s1 + $0x30] sm:$0xff]
  %v29 = vld [vmem:[%s1 + $0x38] sm:$0xff]
  %v30 = vld [vmem:[%s1 + $0x40] sm:$0xff]
  %v31 = vld [vmem:[%s1 + $0x48] sm:$0xff]
  %v32 = vld [vmem:[%s1 + $0x50] sm:$0xff]
  %v33 = vld [vmem:[%s1 + $0x58] sm:$0xff]
  %v34 = vld [vmem:[%s1 + $0x60] sm:$0xff]
  %v35 = vld [vmem:[%s1 + $0x68] sm:$0xff]
  %v36 = vld [vmem:[%s1 + $0x70] sm:$0xff]
  %v37 = vld [vmem:[%s1 + $0x78] sm:$0xff]
  %v38 = vld [vmem:[%s1 + $0x80] sm:$0xff]
  %v39 = vld [vmem:[%s1 + $0x88] sm:$0xff]
  %v40 = vld [vmem:[%s1 + $0x90] sm:$0xff]
  %v41 = vld [vmem:[%s1 + $0x98] sm:$0xff]
  %v42 = vld [vmem:[%s1 + $0xa0] sm:$0xff]
  %v43 = vld [vmem:[%s1 + $0xa8] sm:$0xff]
  %v44 = vld [vmem:[%s1 + $0xb0] sm:$0xff]
  %v45 = vld [vmem:[%s1 + $0xb8] sm:$0xff]
  %v46 = vld [vmem:[%s1 + $0xc0] sm:$0xff]
  %v47 = vld [vmem:[%s1 + $0xc8] sm:$0xff]
  %v48 = vld [vmem:[%s1 + $0xd0] sm:$0xff]
  %v49 = vld [vmem:[%s1 + $0xd8] sm:$0xff]
  %v50 = vld [vmem:[%s1 + $0xe0] sm:$0xff]
  %v51 = vld [vmem:[%s1 + $0xe8] sm:$0xff]
  %v52 = vld [vmem:[%s1 + $0xf0] sm:$0xff]
  %v53 = vld [vmem:[%s1 + $0xf8] sm:$0xff]
  %v54 = vld [vmem:[%s2] sm:$0xff]
  %v55 = vld [vmem:[%s2 + $0x8] sm:$0xff]
  %v56 = vld [vmem:[%s2 + $0x10] sm:$0xff]
  %v57 = vld [vmem:[%s2 + $0x18] sm:$0xff]
  %59 = vset.pattern.permute.xlu0 0
  %60 = vperm.xlu0 %59, %v54
  %v61 = vpop.permute.xlu0 %60
  %64 = vset.pattern.permute.xlu0 0
  %65 = vperm.xlu0 %64, %v55
  %v66 = vpop.permute.xlu0 %65
  %69 = vset.pattern.permute.xlu0 0
  %70 = vperm.xlu0 %69, %v56
  %v71 = vpop.permute.xlu0 %70
  %74 = vset.pattern.permute.xlu0 0
  %75 = vperm.xlu0 %74, %v57
  %v76 = vpop.permute.xlu0 %75
  %78 = vmatprep.subr.mxu0 0.0
  %79 = vmatpush1.msra.mxu0 %v37
  %80 = vmatprep.subr.mxu0 0.0
  %81 = vmatpush1.msra.mxu0 %v36
  %82 = vmatprep.subr.mxu0 0.0
  %83 = vmatpush1.msra.mxu0 %v35
  %84 = vmatprep.subr.mxu0 0.0
  %85 = vmatpush1.msra.mxu0 %v34
  %86 = vmatprep.subr.mxu0 0.0
  %87 = vmatpush1.msra.mxu0 %v33
  %88 = vmatprep.subr.mxu0 0.0
  %89 = vmatpush1.msra.mxu0 %v32
  %90 = vmatprep.subr.mxu0 0.0
  %91 = vmatpush1.msra.mxu0 %v31
  %92 = vmatprep.subr.mxu0 0.0
  %93 = vmatpush1.msra.mxu0 %v30
  %94 = vmatprep.subr.mxu0 0.0
  %95 = vmatpush1.msra.mxu0 %v29
  %96 = vmatprep.subr.mxu0 0.0
  %97 = vmatpush1.msra.mxu0 %v28
  %98 = vmatprep.subr.mxu0 0.0
  %99 = vmatpush1.msra.mxu0 %v27
  %100 = vmatprep.subr.mxu0 0.0
  %101 = vmatpush1.msra.mxu0 %v26
  %102 = vmatprep.subr.mxu0 0.0
  %103 = vmatpush1.msra.mxu0 %v25
  %104 = vmatprep.subr.mxu0 0.0
  %105 = vmatpush1.msra.mxu0 %v24
  %106 = vmatprep.subr.mxu0 0.0
  %107 = vmatpush1.msra.mxu0 %v23
  %108 = vmatprep.subr.mxu0 0.0
  %109 = vmatpush1.msra.mxu0 %v22
  %110 = vmatprep.subr.mxu0 0.0
  %111 = vmatpush2.msra.mxu0 %v53
  %112 = vmatprep.subr.mxu0 0.0
  %113 = vmatpush2.msra.mxu0 %v52
  %114 = vmatprep.subr.mxu0 0.0
  %115 = vmatpush2.msra.mxu0 %v51
  %116 = vmatprep.subr.mxu0 0.0
  %117 = vmatpush2.msra.mxu0 %v50
  %118 = vmatprep.subr.mxu0 0.0
  %119 = vmatpush2.msra.mxu0 %v49
  %120 = vmatprep.subr.mxu0 0.0
  %121 = vmatpush2.msra.mxu0 %v48
  %122 = vmatprep.subr.mxu0 0.0
  %123 = vmatpush2.msra.mxu0 %v47
  %124 = vmatprep.subr.mxu0 0.0
  %125 = vmatpush2.msra.mxu0 %v46
  %126 = vmatprep.subr.mxu0 0.0
  %127 = vmatpush2.msra.mxu0 %v45
  %128 = vmatprep.subr.mxu0 0.0
  %129 = vmatpush2.msra.mxu0 %v44
  %130 = vmatprep.subr.mxu0 0.0
  %131 = vmatpush2.msra.mxu0 %v43
  %132 = vmatprep.subr.mxu0 0.0
  %133 = vmatpush2.msra.mxu0 %v42
  %134 = vmatprep.subr.mxu0 0.0
  %135 = vmatpush2.msra.mxu0 %v41
  %136 = vmatprep.subr.mxu0 0.0
  %137 = vmatpush2.msra.mxu0 %v40
  %138 = vmatprep.subr.mxu0 0.0
  %139 = vmatpush2.msra.mxu0 %v39
  %140 = vmatprep.subr.mxu0 0.0
  %141 = vmatpush2.msra.mxu0 %v38
  %142 = vmatprep.mubr.f32.mxu0 %v15
  %143 = vmatmul.mubr.f32.gmra.mxu0 %v14
  %v144 = vpop.f32.mrf.mxu0
  %v145 = vadd.f32 %v61, %v144
  %v146 = vpop.f32.mrf.mxu0
  %147 = vmatprep.mubr.f32.mxu0 %v17
  %148 = vmatmul.mubr.f32.gmra.mxu0 %v16
  %v149 = vpop.f32.mrf.mxu0
  %v150 = vadd.f32 %v66, %v149
  %v151 = vpop.f32.mrf.mxu0
  %152 = vmatprep.mubr.f32.mxu0 %v19
  %153 = vmatmul.mubr.f32.gmra.mxu0 %v18
  %v154 = vpop.f32.mrf.mxu0
  %v155 = vadd.f32 %v71, %v154
  %v156 = vpop.f32.mrf.mxu0
  %157 = vmatprep.mubr.f32.mxu0 %v21
  %158 = vmatmul.mubr.f32.gmra.mxu0 %v20
  %v159 = vpop.f32.mrf.mxu0
  %v160 = vadd.f32 %v76, %v159
  %v161 = vpop.f32.mrf.mxu0
  %162 = vdwg.mxu0
  %163 = vst [vmem:[%s3] sm:$0xff] %v145
  %164 = vst [vmem:[%s3 + $0x8] sm:$0xff] %v150
  %165 = vst [vmem:[%s3 + $0x10] sm:$0xff] %v155
  %166 = vst [vmem:[%s3 + $0x18] sm:$0xff] %v160
  // Predicated region
  $region14: #{actor_forward.6} parent=0 // pred_check
    _
  $region15: #{actor_forward.6} parent=0 // pred_check_branch
    %168 = sbr.rel (0) target = $region17
  $region16: #{actor_forward.6} parent=0 // pred_region
    _
  $region17: #{actor_forward.6} parent=0 // pred_fallthru
    _
  // Predicated region
  $region18: #{actor_forward.6} parent=0 // pred_check
    _
  $region19: #{actor_forward.6} parent=0 // pred_check_branch
    %170 = sbr.rel (0) target = $region21
  $region20: #{actor_forward.6} parent=0 // pred_region
    _
  $region21: #{actor_forward.6} parent=0 // pred_fallthru
    _

// kernel: actor_forward.7
$region0: #{actor_forward.7}
  #allocation0 [shape = 'u32[]', space=smem, size = 0x4, offset = 0x4, fixed_abs, tag = 'smem constant byte address 0x4 - core index']
  #allocation1 [shape = 'u32[144,128]{1,0:T(1,128)}', space=vmem, size = 0x12000, scoped, tag = 'internal scratch']
  %s0 = inlined_call_operand.vmem [shape: f32[2,32], index: 0, kind: input, shape index: {}]
  %s1 = inlined_call_operand.vmem [shape: f32[32,5], index: 1, kind: input, shape index: {}]
  %s2 = inlined_call_operand.vmem [shape: f32[1,5], index: 2, kind: input, shape index: {}]
  %s3 = inlined_call_operand.hbm [shape: f32[2,5], index: 3, kind: output, shape index: {}]
  %s4 = sld [smem:[#allocation0]]
  $region22: #{actor_forward.7} parent=0
    _
  %s6 = ssub.s32 1, %s4
  %s7 = scalar_select 0, %s6, %s4
  $region1: #{actor_forward.7} parent=0
    #allocation2 [shape = 'u8[1024]{0}', space=vmem, size = 0x400, scoped, tag = 'output window, operand 0, single buffered']
    #allocation3 [shape = 's32[1]{0}', space=sflag, size = 0x4, scoped, tag = 'scoped memory for actor_forward.7']
    %8 = vsyncpa [#allocation3], 0
    // Predicated region
    $region2: #{actor_forward.7} parent=1 // pred_check
      _
    $region3: #{actor_forward.7} parent=1 // pred_check_branch
      %10 = sbr.rel (0) target = $region5
    $region4: #{actor_forward.7} parent=1 // pred_region
      _
    $region5: #{actor_forward.7} parent=1 // pred_fallthru
      _
    // Predicated region
    $region6: #{actor_forward.7} parent=1 // pred_check
      _
    $region7: #{actor_forward.7} parent=1 // pred_check_branch
      %12 = sbr.rel (0) target = $region9
    $region8: #{actor_forward.7} parent=1 // pred_region
      _
    $region9: #{actor_forward.7} parent=1 // pred_fallthru
      _
    // Predicated region
    $region10: #{actor_forward.7} parent=1 // pred_check
      _
    $region11: #{actor_forward.7} parent=1 // pred_check_branch
      %14 = sbr.rel (0) target = $region13
    $region12: #{actor_forward.7} parent=1 // pred_region
      _
    $region13: #{actor_forward.7} parent=1 // pred_fallthru
      _
    %v15 = vld [vmem:[%s0] sm:$0x3]
    %v16 = vmul.f32 %v15, 0.5
    %v17 = vmul.f32 %v15, 0.70710677
    %v18 = verf.f32.pop %v17
    %v19 = vadd.f32 %v18, 1.0
    %v20 = vmul.f32 %v16, %v19
    %v21 = vld [vmem:[%s1] sm:$0xff]
    %v22 = vld [vmem:[%s1 + $0x8] sm:$0xff]
    %v23 = vld [vmem:[%s1 + $0x10] sm:$0xff]
    %v24 = vld [vmem:[%s1 + $0x18] sm:$0xff]
    %v25 = vld [vmem:[%s2] sm:$0x1]
    %v27 = vlaneseq
    %v28 = vshrl.u32 %v27, 7
    %v29 = vsub.s32 0, %v28
    %v30 = vrot.slane %v25, %v29
    %vm32 = vcmask 261120
    %v34 = vsel %vm32, %v20, 0
    %36 = vmatprep.subr.mxu0 0.0
    %37 = vmatpush1.msra.mxu0 0.0
    %38 = vmatprep.subr.mxu0 0.0
    %39 = vmatpush1.msra.mxu0 0.0
    %40 = vmatprep.subr.mxu0 0.0
    %41 = vmatpush1.msra.mxu0 0.0
    %42 = vmatprep.subr.mxu0 0.0
    %43 = vmatpush1.msra.mxu0 0.0
    %44 = vmatprep.subr.mxu0 0.0
    %45 = vmatpush1.msra.mxu0 0.0
    %46 = vmatprep.subr.mxu0 0.0
    %47 = vmatpush1.msra.mxu0 0.0
    %48 = vmatprep.subr.mxu0 0.0
    %49 = vmatpush1.msra.mxu0 0.0
    %50 = vmatprep.subr.mxu0 0.0
    %51 = vmatpush1.msra.mxu0 0.0
    %52 = vmatprep.subr.mxu0 0.0
    %53 = vmatpush1.msra.mxu0 0.0
    %54 = vmatprep.subr.mxu0 0.0
    %55 = vmatpush1.msra.mxu0 0.0
    %56 = vmatprep.subr.mxu0 0.0
    %57 = vmatpush1.msra.mxu0 0.0
    %58 = vmatprep.subr.mxu0 0.0
    %59 = vmatpush1.msra.mxu0 0.0
    %60 = vmatprep.subr.mxu0 0.0
    %61 = vmatpush1.msra.mxu0 %v24
    %62 = vmatprep.subr.mxu0 0.0
    %63 = vmatpush1.msra.mxu0 %v23
    %64 = vmatprep.subr.mxu0 0.0
    %65 = vmatpush1.msra.mxu0 %v22
    %66 = vmatprep.subr.mxu0 0.0
    %67 = vmatpush1.msra.mxu0 %v21
    %68 = vmatprep.subr.mxu0 0.0
    %69 = vmatpush2.msra.mxu0 0.0
    %70 = vmatprep.subr.mxu0 0.0
    %71 = vmatpush2.msra.mxu0 0.0
    %72 = vmatprep.subr.mxu0 0.0
    %73 = vmatpush2.msra.mxu0 0.0
    %74 = vmatprep.subr.mxu0 0.0
    %75 = vmatpush2.msra.mxu0 0.0
    %76 = vmatprep.subr.mxu0 0.0
    %77 = vmatpush2.msra.mxu0 0.0
    %78 = vmatprep.subr.mxu0 0.0
    %79 = vmatpush2.msra.mxu0 0.0
    %80 = vmatprep.subr.mxu0 0.0
    %81 = vmatpush2.msra.mxu0 0.0
    %82 = vmatprep.subr.mxu0 0.0
    %83 = vmatpush2.msra.mxu0 0.0
    %84 = vmatprep.subr.mxu0 0.0
    %85 = vmatpush2.msra.mxu0 0.0
    %86 = vmatprep.subr.mxu0 0.0
    %87 = vmatpush2.msra.mxu0 0.0
    %88 = vmatprep.subr.mxu0 0.0
    %89 = vmatpush2.msra.mxu0 0.0
    %90 = vmatprep.subr.mxu0 0.0
    %91 = vmatpush2.msra.mxu0 0.0
    %92 = vmatprep.subr.mxu0 0.0
    %93 = vmatpush2.msra.mxu0 0.0
    %94 = vmatprep.subr.mxu0 0.0
    %95 = vmatpush2.msra.mxu0 0.0
    %96 = vmatprep.subr.mxu0 0.0
    %97 = vmatpush2.msra.mxu0 0.0
    %98 = vmatprep.subr.mxu0 0.0
    %99 = vmatpush2.msra.mxu0 0.0
    %100 = vmatprep.mubr.f32.mxu0 0.0
    %101 = vmatmul.mubr.f32.gmra.mxu0 %v34
    %v102 = vpop.f32.mrf.mxu0
    %v103 = vadd.f32 %v30, %v102
    %v104 = vpop.f32.mrf.mxu0
    %105 = vdwg.mxu0
    %vm106 = vcmask 33792
    %107 = vst.msk [vmem:[#allocation2] sm:$0x3] %vm106, %v103
    // Predicated region
    $region14: #{actor_forward.7} parent=1 // pred_check
      _
    $region15: #{actor_forward.7} parent=1 // pred_check_branch
      %109 = sbr.rel (0) target = $region17
    $region16: #{actor_forward.7} parent=1 // pred_region
      %s111 = ssub.s32 32, 32
      %112 = vsyncadd [#allocation3], %s111
      %s114 = sshll.u32 [#allocation2], 4
      %s115 = int_to_ptr.vmem [resolvable:$true] %s114
      %117 = dma.vmem_to_hbm [thread:$0]  %s115, 32, %s3, [#allocation3]
    $region17: #{actor_forward.7} parent=1 // pred_fallthru
      _
    // Predicated region
    $region18: #{actor_forward.7} parent=1 // pred_check
      _
    $region19: #{actor_forward.7} parent=1 // pred_check_branch
      %119 = sbr.rel (0) target = $region21
    $region20: #{actor_forward.7} parent=1 // pred_region
      %120 = dma.done [#allocation3], 32
    $region21: #{actor_forward.7} parent=1 // pred_fallthru
      _
    %121 = vsyncpa [#allocation3], 1

</llo_original>
